<compile_context>
chip_gen: v7x
topology: tpu7x:2x2x1
jax: 0.10.0
libtpu: 0.0.40
codegen_flags: <defaults>
</compile_context>

<pallas_src>
import jax
import jax.numpy as jnp
from jax.experimental import pallas as pl
from jax.experimental.pallas import tpu as pltpu

# Model structure of textCNNv1 (out_channels=100, kernel heights 3/4/5, FC 300->2),
# with a reduced input_size=(L=16, E=128) and a small demo batch.
B, L, E = 16, 16, 128
C = 100                      # real conv output channels
CP = 128                     # channels padded to a full lane tile
KS = (3, 4, 5)
KMAX = KS[-1]
LP = 24                      # time dim zero-padded to >= L + KMAX - 1, multiple of 8
NUM_CLASSES = 2
BT = 8                       # batch tile per grid step
FEAT = len(KS) * CP          # 384
NEG = -1e30                  # additive mask for invalid time positions


def textcnn_kernel(x_ref, w_ref, bm_ref, wfc_ref, bfc_ref, out_ref):
    x = x_ref[...]                                           # (BT, LP, E) bf16, rows >= L are 0
    # im2col: concatenate the KMAX shifted taps on the lane axis (128-aligned).
    xcol = jnp.concatenate([x[:, dk:dk + L, :] for dk in range(KMAX)], axis=-1)
    xcol = xcol.reshape(BT * L, KMAX * E)                    # (BT*L, 5*E) bf16

    # One MXU matmul covers all three conv branches (M=128, K=640, N=384).
    acc = jnp.dot(xcol, w_ref[...], preferred_element_type=jnp.float32)   # (BT*L, 384) f32
    acc = acc.reshape(BT, L, FEAT)

    # Fused conv bias + invalid-time mask (-1e30 where t + k > L) + ReLU.
    # Exact: masked positions become 0 and ReLU output >= 0, so they never
    # win the time max-pool.
    acc = jnp.maximum(acc + bm_ref[...], 0.0)                # (BT, L, 384) f32

    feat = jnp.max(acc, axis=1)                              # MaxPool1d over time -> (BT, 384)

    # TODO(synk): dropout is identity at inference; training-mode dropout would
    # need pltpu.prng_seed / pltpu.prng_random_bits masking here.

    logits = jnp.dot(feat, wfc_ref[...],
                     preferred_element_type=jnp.float32) + bfc_ref[...]   # (BT, 2)
    m = jnp.max(logits, axis=-1, keepdims=True)
    z = logits - m
    out_ref[...] = z - jnp.log(jnp.sum(jnp.exp(z), axis=-1, keepdims=True))   # log_softmax


def pack_params(params):
    """Pack PyTorch-layout params into the fused / channel-padded kernel layout."""
    w_big = jnp.zeros((KMAX * E, FEAT), jnp.float32)         # (640, 384)
    bm = jnp.zeros((L, FEAT), jnp.float32)                   # fused bias + time mask
    wfc_big = jnp.zeros((FEAT, NUM_CLASSES), jnp.float32)    # padded rows stay 0
    t = jnp.arange(L)[:, None]
    for j, k in enumerate(KS):
        w = params[f"w{k}"][:, 0]                            # (C, k, E)
        for dk in range(k):
            w_big = w_big.at[dk * E:(dk + 1) * E, j * CP:j * CP + C].set(w[:, dk, :].T)
        col = jnp.zeros((L, CP), jnp.float32)
        col = col.at[:, :C].set(jnp.broadcast_to(params[f"b{k}"][None, :], (L, C)))
        col = jnp.where(t <= L - k, col, NEG)                # invalid time rows -> -1e30
        bm = bm.at[:, j * CP:(j + 1) * CP].set(col)
        wfc_big = wfc_big.at[j * CP:j * CP + C, :].set(params["wfc"][:, j * C:(j + 1) * C].T)
    bfc_big = params["bfc"].reshape(1, NUM_CLASSES).astype(jnp.float32)
    return w_big.astype(jnp.bfloat16), bm[None], wfc_big, bfc_big


def textcnn_forward(x_nchw, params):
    assert B % BT == 0
    w_big, bm, wfc_big, bfc_big = pack_params(params)
    x = x_nchw[:, 0].astype(jnp.bfloat16)                    # (B, L, E), bf16
    x = jnp.pad(x, ((0, 0), (0, LP - L), (0, 0)))            # zero-pad time (layout plumbing)
    return pl.pallas_call(
        textcnn_kernel,
        out_shape=jax.ShapeDtypeStruct((B, NUM_CLASSES), jnp.float32),
        grid=(B // BT,),
        in_specs=[
            pl.BlockSpec((BT, LP, E), lambda i: (i, 0, 0)),
            # Constant block indices -> weights / bias-mask stay VMEM-resident.
            pl.BlockSpec((KMAX * E, FEAT), lambda i: (0, 0)),
            pl.BlockSpec((1, L, FEAT), lambda i: (0, 0, 0)),
            pl.BlockSpec((FEAT, NUM_CLASSES), lambda i: (0, 0)),
            pl.BlockSpec((1, NUM_CLASSES), lambda i: (0, 0)),
        ],
        out_specs=pl.BlockSpec((BT, NUM_CLASSES), lambda i: (i, 0)),
        compiler_params=pltpu.CompilerParams(dimension_semantics=("parallel",)),
    )(x, w_big, bm, wfc_big, bfc_big)


def textcnn_ref(x_nchw, params):
    """Pure-JAX reference (PyTorch forward in eval mode, mirroring the bf16 conv inputs)."""
    x = x_nchw[:, 0].astype(jnp.bfloat16).astype(jnp.float32)
    feats = []
    for k in KS:
        w = params[f"w{k}"][:, 0].astype(jnp.bfloat16).astype(jnp.float32)  # (C, k, E)
        bb = params[f"b{k}"]
        lout = L - k + 1
        acc = jnp.zeros((B, lout, C), jnp.float32)
        for dk in range(k):
            acc = acc + jnp.einsum("ble,ce->blc", x[:, dk:dk + lout, :], w[:, dk, :],
                                   precision="highest")
        acc = jnp.maximum(acc + bb[None, None, :], 0.0)
        feats.append(jnp.max(acc, axis=1))
    feat = jnp.concatenate(feats, axis=-1)                   # (B, 300)
    logits = jnp.einsum("bf,cf->bc", feat, params["wfc"], precision="highest") + params["bfc"]
    return jax.nn.log_softmax(logits, axis=-1)


if __name__ == "__main__":
    key = jax.random.PRNGKey(0)
    ks = jax.random.split(key, 9)
    scale = 0.05
    # Input in PyTorch NCHW layout (B, 1, L, E); params in PyTorch layouts.
    x = jax.random.normal(ks[0], (B, 1, L, E), jnp.float32)
    params = {
        "w3": scale * jax.random.normal(ks[1], (C, 1, 3, E), jnp.float32),
        "b3": scale * jax.random.normal(ks[2], (C,), jnp.float32),
        "w4": scale * jax.random.normal(ks[3], (C, 1, 4, E), jnp.float32),
        "b4": scale * jax.random.normal(ks[4], (C,), jnp.float32),
        "w5": scale * jax.random.normal(ks[5], (C, 1, 5, E), jnp.float32),
        "b5": scale * jax.random.normal(ks[6], (C,), jnp.float32),
        "wfc": scale * jax.random.normal(ks[7], (NUM_CLASSES, 3 * C), jnp.float32),
        "bfc": scale * jax.random.normal(ks[8], (NUM_CLASSES,), jnp.float32),
    }

    out = jax.block_until_ready(textcnn_forward(x, params))
    ref = textcnn_ref(x, params)

    assert out.shape == (B, NUM_CLASSES), out.shape
    assert jnp.allclose(out, ref, atol=1e-3, rtol=1e-3), (out, ref)
    print("KERNEL_OK")
</pallas_src>

<mosaic_0001>
module attributes {stable_mosaic.version = 11 : i64} {
  func.func @textcnn_kernel(%arg0: i32, %arg1: memref<8x24x128xbf16, #tpu.memory_space<vmem>>, %arg2: memref<640x384xbf16, #tpu.memory_space<vmem>>, %arg3: memref<1x16x384xf32, #tpu.memory_space<vmem>>, %arg4: memref<384x2xf32, #tpu.memory_space<vmem>>, %arg5: memref<1x2xf32, #tpu.memory_space<vmem>>, %arg6: memref<8x2xf32, #tpu.memory_space<vmem>>) attributes {dimension_semantics = [#tpu.dimension_semantics<parallel>], iteration_bounds = array<i64: 2>, scalar_prefetch = 0 : i64, scratch_operands = 0 : i64, tpu.core_type = #tpu.core_type<tc>, window_params = [{transform_indices = @transform_0, window_bounds = array<i64: 8, 24, 128>}, {pipeline_mode = #tpu.pipeline_mode<synchronous>, transform_indices = @transform_1, window_bounds = array<i64: 640, 384>}, {pipeline_mode = #tpu.pipeline_mode<synchronous>, transform_indices = @transform_2, window_bounds = array<i64: 1, 16, 384>}, {pipeline_mode = #tpu.pipeline_mode<synchronous>, transform_indices = @transform_3, window_bounds = array<i64: 384, 2>}, {pipeline_mode = #tpu.pipeline_mode<synchronous>, transform_indices = @transform_4, window_bounds = array<i64: 1, 2>}, {transform_indices = @transform_5, window_bounds = array<i64: 8, 2>}]} {
    %c0 = arith.constant 0 : index
    %c0_0 = arith.constant 0 : index
    %c0_1 = arith.constant 0 : index
    %0 = vector.load %arg1[%c0, %c0_0, %c0_1] : memref<8x24x128xbf16, #tpu.memory_space<vmem>>, vector<8x24x128xbf16>
    %1 = vector.extract_strided_slice %0 {offsets = [0, 0, 0], sizes = [8, 16, 128], strides = [1, 1, 1]} : vector<8x24x128xbf16> to vector<8x16x128xbf16>
    %2 = vector.extract_strided_slice %0 {offsets = [0, 1, 0], sizes = [8, 16, 128], strides = [1, 1, 1]} : vector<8x24x128xbf16> to vector<8x16x128xbf16>
    %3 = vector.extract_strided_slice %0 {offsets = [0, 2, 0], sizes = [8, 16, 128], strides = [1, 1, 1]} : vector<8x24x128xbf16> to vector<8x16x128xbf16>
    %4 = vector.extract_strided_slice %0 {offsets = [0, 3, 0], sizes = [8, 16, 128], strides = [1, 1, 1]} : vector<8x24x128xbf16> to vector<8x16x128xbf16>
    %5 = vector.extract_strided_slice %0 {offsets = [0, 4, 0], sizes = [8, 16, 128], strides = [1, 1, 1]} : vector<8x24x128xbf16> to vector<8x16x128xbf16>
    %6 = tpu.concatenate %1, %2, %3, %4, %5 in 2 : vector<8x16x128xbf16>, vector<8x16x128xbf16>, vector<8x16x128xbf16>, vector<8x16x128xbf16>, vector<8x16x128xbf16> -> vector<8x16x640xbf16>
    %7 = vector.shape_cast %6 : vector<8x16x640xbf16> to vector<128x640xbf16>
    %c0_2 = arith.constant 0 : index
    %c0_3 = arith.constant 0 : index
    %8 = vector.load %arg2[%c0_2, %c0_3] : memref<640x384xbf16, #tpu.memory_space<vmem>>, vector<640x384xbf16>
    %cst = arith.constant dense<0.000000e+00> : vector<128x384xf32>
    %9 = tpu.matmul %7, %8, %cst {dimension_numbers = #tpu.dot_dimension_numbers<[1], [0], [0], [1], [0, 0, 1, 1], [], []>} : vector<128x640xbf16>, vector<640x384xbf16>, vector<128x384xf32> -> vector<128x384xf32>
    %10 = vector.shape_cast %9 : vector<128x384xf32> to vector<8x16x384xf32>
    %c0_4 = arith.constant 0 : index
    %c0_5 = arith.constant 0 : index
    %c0_6 = arith.constant 0 : index
    %11 = vector.load %arg3[%c0_4, %c0_5, %c0_6] : memref<1x16x384xf32, #tpu.memory_space<vmem>>, vector<1x16x384xf32>
    %12 = vector.broadcast %11 : vector<1x16x384xf32> to vector<8x16x384xf32>
    %13 = arith.addf %10, %12 : vector<8x16x384xf32>
    %cst_7 = arith.constant 0.000000e+00 : f32
    %14 = vector.broadcast %cst_7 : f32 to vector<8x16x384xf32>
    %15 = arith.maximumf %13, %14 : vector<8x16x384xf32>
    %cst_8 = arith.constant dense<0xFF800000> : vector<8x384xf32>
    %16 = vector.multi_reduction <maximumf>, %15, %cst_8 [1] : vector<8x16x384xf32> to vector<8x384xf32>
    %c0_9 = arith.constant 0 : index
    %c0_10 = arith.constant 0 : index
    %17 = vector.load %arg4[%c0_9, %c0_10] : memref<384x2xf32, #tpu.memory_space<vmem>>, vector<384x2xf32>
    %cst_11 = arith.constant dense<0.000000e+00> : vector<8x2xf32>
    %18 = tpu.matmul %16, %17, %cst_11 {dimension_numbers = #tpu.dot_dimension_numbers<[1], [0], [0], [1], [0, 0, 1, 1], [], []>} : vector<8x384xf32>, vector<384x2xf32>, vector<8x2xf32> -> vector<8x2xf32>
    %c0_12 = arith.constant 0 : index
    %c0_13 = arith.constant 0 : index
    %19 = vector.load %arg5[%c0_12, %c0_13] : memref<1x2xf32, #tpu.memory_space<vmem>>, vector<1x2xf32>
    %20 = vector.broadcast %19 : vector<1x2xf32> to vector<8x2xf32>
    %21 = arith.addf %18, %20 : vector<8x2xf32>
    %cst_14 = arith.constant dense<0xFF800000> : vector<8xf32>
    %22 = vector.multi_reduction <maximumf>, %21, %cst_14 [1] : vector<8x2xf32> to vector<8xf32>
    %23 = vector.shape_cast %22 : vector<8xf32> to vector<8x1xf32>
    %24 = vector.broadcast %23 : vector<8x1xf32> to vector<8x2xf32>
    %25 = arith.subf %21, %24 : vector<8x2xf32>
    %26 = math.exp %25 : vector<8x2xf32>
    %cst_15 = arith.constant dense<0.000000e+00> : vector<8xf32>
    %27 = vector.multi_reduction <add>, %26, %cst_15 [1] : vector<8x2xf32> to vector<8xf32>
    %28 = vector.shape_cast %27 : vector<8xf32> to vector<8x1xf32>
    %29 = math.log %28 : vector<8x1xf32>
    %30 = vector.broadcast %29 : vector<8x1xf32> to vector<8x2xf32>
    %31 = arith.subf %25, %30 : vector<8x2xf32>
    %c0_16 = arith.constant 0 : index
    %c0_17 = arith.constant 0 : index
    %32 = vector.load %arg6[%c0_16, %c0_17] : memref<8x2xf32, #tpu.memory_space<vmem>>, vector<8x2xf32>
    tpu.vector_store %arg6[%c0_16, %c0_17], %31 {strides = array<i32>} : memref<8x2xf32, #tpu.memory_space<vmem>>, vector<8x2xf32>,
    return
  }
  func.func @transform_0(%arg0: i32) -> (i32, i32, i32) {
    %c0_i32 = arith.constant 0 : i32
    %c0_i32_0 = arith.constant 0 : i32
    %c0_i32_1 = arith.constant 0 : i32
    return %arg0, %c0_i32, %c0_i32_0 : i32, i32, i32
  }
  func.func @transform_1(%arg0: i32) -> (i32, i32) {
    %c0_i32 = arith.constant 0 : i32
    %c0_i32_0 = arith.constant 0 : i32
    %c0_i32_1 = arith.constant 0 : i32
    return %c0_i32, %c0_i32_0 : i32, i32
  }
  func.func @transform_2(%arg0: i32) -> (i32, i32, i32) {
    %c0_i32 = arith.constant 0 : i32
    %c0_i32_0 = arith.constant 0 : i32
    %c0_i32_1 = arith.constant 0 : i32
    %c0_i32_2 = arith.constant 0 : i32
    return %c0_i32, %c0_i32_0, %c0_i32_1 : i32, i32, i32
  }
  func.func @transform_3(%arg0: i32) -> (i32, i32) {
    %c0_i32 = arith.constant 0 : i32
    %c0_i32_0 = arith.constant 0 : i32
    %c0_i32_1 = arith.constant 0 : i32
    return %c0_i32, %c0_i32_0 : i32, i32
  }
  func.func @transform_4(%arg0: i32) -> (i32, i32) {
    %c0_i32 = arith.constant 0 : i32
    %c0_i32_0 = arith.constant 0 : i32
    %c0_i32_1 = arith.constant 0 : i32
    return %c0_i32, %c0_i32_0 : i32, i32
  }
  func.func @transform_5(%arg0: i32) -> (i32, i32) {
    %c0_i32 = arith.constant 0 : i32
    %c0_i32_0 = arith.constant 0 : i32
    return %arg0, %c0_i32 : i32, i32
  }
}

</mosaic_0001>

<llo_original>
// kernel: tpu_custom_call.1
$region0: #{tpu_custom_call.1}
  #allocation0 [shape = 'u32[]', space=smem, size = 0x4, offset = 0x4, fixed_abs, tag = 'smem constant byte address 0x4 - core index']
  #allocation1 [shape = 'u32[144,128]{1,0:T(1,128)}', space=vmem, size = 0x12000, scoped, tag = 'internal scratch']
  %s0 = inlined_call_operand.vmem [shape: bf16[16,24,128], index: 0, kind: input, shape index: {}]
  %s1 = inlined_call_operand.hbm [shape: bf16[640,384], index: 1, kind: input, shape index: {}]
  %s2 = inlined_call_operand.vmem [shape: f32[1,16,384], index: 2, kind: input, shape index: {}]
  %s3 = inlined_call_operand.vmem [shape: f32[384,2], index: 3, kind: input, shape index: {}]
  %s4 = inlined_call_operand.vmem [shape: f32[1,2], index: 4, kind: input, shape index: {}]
  %s5 = inlined_call_operand.vmem [shape: f32[16,2], index: 5, kind: output, shape index: {}]
  %s6 = sld [smem:[#allocation0]]
  $region57: #{tpu_custom_call.1} parent=0
    _
  %s8 = ssub.s32 1, %s6
  %s9 = scalar_select 0, %s8, %s6
  $region1: #{tpu_custom_call.1} parent=0
    #allocation2 [shape = 'u8[491520]{0}', space=vmem, size = 0x78000, scoped, tag = 'input window, operand 1, single buffered']
    #allocation3 [shape = 's32[2]{0}', space=sflag, size = 0x8, scoped, tag = 'scoped memory for tpu_custom_call.1']
    %10 = vsyncpa [#allocation3], 0
    loop: start=0, step=1, limit=4
    $region2: #{tpu_custom_call.1} parent=1 // loop_pre_header
      _
    $region3: #{tpu_custom_call.1} parent=1 // loop_header
      %s12 = sphi 0, %s16
      %p13 = scmp.ge.s32.totalorder %s12, 4
      %s22 = sphi 0, %s24
      %s25 = sphi 0, %s22
      %s26 = sphi 0, %s25
      %s42 = sphi 0, %s26
      %s46 = sphi 0, %s46
      %s48 = sphi 0, %s46
      %s49 = sphi 0, %s48
      %s63 = sphi 0, %s49
      %s67 = sphi 0, %s67
      %s69 = sphi 0, %s67
      %s70 = sphi 0, %s69
      %s84 = sphi 0, %s70
      %s88 = sphi 0, %s88
      %s90 = sphi 0, %s88
      %s91 = sphi 0, %s90
      %s105 = sphi 0, %s91
      %s109 = sphi 0, %s109
      %s111 = sphi 0, %s109
      %s112 = sphi 0, %s111
      %s126 = sphi 0, %s112
      %s132 = sphi 0, %s134
      %s135 = sphi 0, %s132
      %s136 = sphi 0, %s135
      %s152 = sphi 0, %s136
    $region4: #{tpu_custom_call.1} parent=1 // loop_header_branch
      %15 = sbr.rel (%p13) target = $region8
    $region5: #{tpu_custom_call.1} parent=1 // loop_body
      %s17 = ssub.s32 %s12, 1
      %s18 = ssub.s32 %s12, 2
      %s19 = sadd.s32 %s12, 1
      %s20 = ssub.s32 %s12, %s19
      %p21 = scmp.eq.s32.totalorder %s20, 0
      %s23 = sadd.s32 %s22, 1
      %s24 = scalar_select %p21, %s22, %s23
      %p27 = pneg %p21
      %p28 = scmp.eq.s32.totalorder %s12, 1
      %p29 = por %p27, %p28
      %p30 = scmp.ne.s32.totalorder %s22, %s25
      %p31 = scmp.eq.s32.totalorder %s12, 0
      %p32 = por %p30, %p31
      %p33 = scmp.ne.s32.totalorder %s22, %s25
      %p34 = scmp.eq.s32.totalorder %s17, 1
      %p35 = por %p33, %p34
      %p36 = scmp.ne.s32.totalorder %s25, %s26
      %p37 = scmp.eq.s32.totalorder %s17, 0
      %p38 = por %p36, %p37
      %p39 = scmp.ne.s32.totalorder %s25, %s26
      %p40 = scmp.eq.s32.totalorder %s18, 1
      %p41 = por %p39, %p40
      %p43 = scmp.ne.s32.totalorder %s26, %s42
      %p44 = scmp.eq.s32.totalorder %s18, 0
      %p45 = por %p43, %p44
      %s47 = sadd.s32 %s46, 1
      %p50 = scmp.eq.s32.totalorder %s12, 1
      %p51 = scmp.ne.s32.totalorder %s46, %s48
      %p52 = scmp.eq.s32.totalorder %s12, 0
      %p53 = por %p51, %p52
      %p54 = scmp.ne.s32.totalorder %s46, %s48
      %p55 = scmp.eq.s32.totalorder %s17, 1
      %p56 = por %p54, %p55
      %p57 = scmp.ne.s32.totalorder %s48, %s49
      %p58 = scmp.eq.s32.totalorder %s17, 0
      %p59 = por %p57, %p58
      %p60 = scmp.ne.s32.totalorder %s48, %s49
      %p61 = scmp.eq.s32.totalorder %s18, 1
      %p62 = por %p60, %p61
      %p64 = scmp.ne.s32.totalorder %s49, %s63
      %p65 = scmp.eq.s32.totalorder %s18, 0
      %p66 = por %p64, %p65
      %s68 = sadd.s32 %s67, 1
      %p71 = scmp.eq.s32.totalorder %s12, 1
      %p72 = scmp.ne.s32.totalorder %s67, %s69
      %p73 = scmp.eq.s32.totalorder %s12, 0
      %p74 = por %p72, %p73
      %p75 = scmp.ne.s32.totalorder %s67, %s69
      %p76 = scmp.eq.s32.totalorder %s17, 1
      %p77 = por %p75, %p76
      %p78 = scmp.ne.s32.totalorder %s69, %s70
      %p79 = scmp.eq.s32.totalorder %s17, 0
      %p80 = por %p78, %p79
      %p81 = scmp.ne.s32.totalorder %s69, %s70
      %p82 = scmp.eq.s32.totalorder %s18, 1
      %p83 = por %p81, %p82
      %p85 = scmp.ne.s32.totalorder %s70, %s84
      %p86 = scmp.eq.s32.totalorder %s18, 0
      %p87 = por %p85, %p86
      %s89 = sadd.s32 %s88, 1
      %p92 = scmp.eq.s32.totalorder %s12, 1
      %p93 = scmp.ne.s32.totalorder %s88, %s90
      %p94 = scmp.eq.s32.totalorder %s12, 0
      %p95 = por %p93, %p94
      %p96 = scmp.ne.s32.totalorder %s88, %s90
      %p97 = scmp.eq.s32.totalorder %s17, 1
      %p98 = por %p96, %p97
      %p99 = scmp.ne.s32.totalorder %s90, %s91
      %p100 = scmp.eq.s32.totalorder %s17, 0
      %p101 = por %p99, %p100
      %p102 = scmp.ne.s32.totalorder %s90, %s91
      %p103 = scmp.eq.s32.totalorder %s18, 1
      %p104 = por %p102, %p103
      %p106 = scmp.ne.s32.totalorder %s91, %s105
      %p107 = scmp.eq.s32.totalorder %s18, 0
      %p108 = por %p106, %p107
      %s110 = sadd.s32 %s109, 1
      %p113 = scmp.eq.s32.totalorder %s12, 1
      %p114 = scmp.ne.s32.totalorder %s109, %s111
      %p115 = scmp.eq.s32.totalorder %s12, 0
      %p116 = por %p114, %p115
      %p117 = scmp.ne.s32.totalorder %s109, %s111
      %p118 = scmp.eq.s32.totalorder %s17, 1
      %p119 = por %p117, %p118
      %p120 = scmp.ne.s32.totalorder %s111, %s112
      %p121 = scmp.eq.s32.totalorder %s17, 0
      %p122 = por %p120, %p121
      %p123 = scmp.ne.s32.totalorder %s111, %s112
      %p124 = scmp.eq.s32.totalorder %s18, 1
      %p125 = por %p123, %p124
      %p127 = scmp.ne.s32.totalorder %s112, %s126
      %p128 = scmp.eq.s32.totalorder %s18, 0
      %p129 = por %p127, %p128
      %s130 = ssub.s32 %s12, %s19
      %p131 = scmp.eq.s32.totalorder %s130, 0
      %s133 = sadd.s32 %s132, 1
      %s134 = scalar_select %p131, %s132, %s133
      %p137 = pneg %p131
      %p138 = scmp.eq.s32.totalorder %s12, 1
      %p139 = por %p137, %p138
      %p140 = scmp.ne.s32.totalorder %s132, %s135
      %p141 = scmp.eq.s32.totalorder %s12, 0
      %p142 = por %p140, %p141
      %p143 = scmp.ne.s32.totalorder %s132, %s135
      %p144 = scmp.eq.s32.totalorder %s17, 1
      %p145 = por %p143, %p144
      %p146 = scmp.ne.s32.totalorder %s135, %s136
      %p147 = scmp.eq.s32.totalorder %s17, 0
      %p148 = por %p146, %p147
      %p149 = scmp.ne.s32.totalorder %s135, %s136
      %p150 = scmp.eq.s32.totalorder %s18, 1
      %p151 = por %p149, %p150
      %p153 = scmp.ne.s32.totalorder %s136, %s152
      %p154 = scmp.eq.s32.totalorder %s18, 0
      %p155 = por %p153, %p154
      %p156 = scmp.le.s32.totalorder 1, %s12
      %p157 = scmp.lt.s32.totalorder %s12, 3
      %p158 = pnand %p156, %p157
      %p159 = pneg %p158
      // Predicated region
      $region9: #{tpu_custom_call.1} parent=5 // pred_check
        _
      $region10: #{tpu_custom_call.1} parent=5 // pred_check_branch
        %161 = sbr.rel (%p158) target = $region12
      $region11: #{tpu_custom_call.1} parent=5 // pred_region
        %s162 = ssub.s32 %s12, 1
        // Predicated region
        $region13: #{tpu_custom_call.1} parent=11 // pred_check
          %p163 = pneg %p59
        $region14: #{tpu_custom_call.1} parent=11 // pred_check_branch
          %165 = sbr.rel (%p163) target = $region16
        $region15: #{tpu_custom_call.1} parent=11 // pred_region
          %s167 = ssub.s32 15360, 15360
          %168 = vsyncadd [#allocation3], %s167
          %s169 = sshll.u32 [#allocation2], 4
          %s170 = int_to_ptr.vmem [resolvable:$true] %s169
          %175 = dma.hbm_to_vmem [thread:$0]  %s1, 15360, %s170, [#allocation3], 192, 192, 12
        $region16: #{tpu_custom_call.1} parent=11 // pred_fallthru
          _
        // Predicated region
        $region17: #{tpu_custom_call.1} parent=11 // pred_check
          %p176 = pneg %p80
        $region18: #{tpu_custom_call.1} parent=11 // pred_check_branch
          %178 = sbr.rel (%p176) target = $region20
        $region19: #{tpu_custom_call.1} parent=11 // pred_region
          _
        $region20: #{tpu_custom_call.1} parent=11 // pred_fallthru
          _
        // Predicated region
        $region21: #{tpu_custom_call.1} parent=11 // pred_check
          %p179 = pneg %p101
        $region22: #{tpu_custom_call.1} parent=11 // pred_check_branch
          %181 = sbr.rel (%p179) target = $region24
        $region23: #{tpu_custom_call.1} parent=11 // pred_region
          _
        $region24: #{tpu_custom_call.1} parent=11 // pred_fallthru
          _
        // Predicated region
        $region25: #{tpu_custom_call.1} parent=11 // pred_check
          %p182 = pneg %p122
        $region26: #{tpu_custom_call.1} parent=11 // pred_check_branch
          %184 = sbr.rel (%p182) target = $region28
        $region27: #{tpu_custom_call.1} parent=11 // pred_region
          _
        $region28: #{tpu_custom_call.1} parent=11 // pred_fallthru
          _
      $region12: #{tpu_custom_call.1} parent=5 // pred_fallthru
        _
      %p185 = scmp.lt.s32.totalorder %s12, 2
      // Predicated region
      $region29: #{tpu_custom_call.1} parent=5 // pred_check
        %p186 = pneg %p185
      $region30: #{tpu_custom_call.1} parent=5 // pred_check_branch
        %188 = sbr.rel (%p186) target = $region32
      $region31: #{tpu_custom_call.1} parent=5 // pred_region
        // Predicated region
        $region33: #{tpu_custom_call.1} parent=31 // pred_check
          %p189 = pneg %p32
        $region34: #{tpu_custom_call.1} parent=31 // pred_check_branch
          %191 = sbr.rel (%p189) target = $region36
        $region35: #{tpu_custom_call.1} parent=31 // pred_region
          %s192 = smul.u32 8, %s12
          %p193 = scmp.lt.s32.totalorder %s192, 15
          %s194 = scalar_select %p193, %s192, 15
          %s195 = smul.addr %s194, 3
          %s196 = smul.addr %s195, 4
          %s197 = scalar_lea.vmem %s0, %s196
          %s198 = smul.u32 8, %s12
        $region36: #{tpu_custom_call.1} parent=31 // pred_fallthru
          _
      $region32: #{tpu_custom_call.1} parent=5 // pred_fallthru
        _
      %p199 = scmp.le.s32.totalorder 1, %s12
      %p200 = scmp.lt.s32.totalorder %s12, 3
      %p201 = pnand %p199, %p200
      %p202 = pneg %p201
      // Predicated region
      $region37: #{tpu_custom_call.1} parent=5 // pred_check
        _
      $region38: #{tpu_custom_call.1} parent=5 // pred_check_branch
        %204 = sbr.rel (%p201) target = $region40
      $region39: #{tpu_custom_call.1} parent=5 // pred_region
        %s205 = ssub.s32 %s12, 1
        // Predicated region
        $region41: #{tpu_custom_call.1} parent=39 // pred_check
          %p206 = pneg %p59
        $region42: #{tpu_custom_call.1} parent=39 // pred_check_branch
          %208 = sbr.rel (%p206) target = $region44
        $region43: #{tpu_custom_call.1} parent=39 // pred_region
          %209 = dma.done [#allocation3], 15360
        $region44: #{tpu_custom_call.1} parent=39 // pred_fallthru
          _
        %s210 = smul.u32 8, %s17
        %p211 = scmp.lt.s32.totalorder %s210, 15
        %s212 = scalar_select %p211, %s210, 15
        %s213 = smul.addr %s212, 3
        %s214 = smul.addr %s213, 4
        %s215 = scalar_lea.vmem %s0, %s214
        %p216 = pneg %p38
        %p217 = pneg %p35
        %p218 = pneg %p59
        %p219 = pneg %p56
        %p220 = pneg %p80
        %p221 = pneg %p77
        %p222 = pneg %p101
        %p223 = pneg %p98
        %p224 = pneg %p122
        %p225 = pneg %p119
        %p226 = pneg %p148
        %p227 = pneg %p145
        %p228 = scmp.lt.s32.totalorder %s17, 1
        %s229 = scalar_select %p228, %s17, 1
        %s230 = smul.addr %s229, 8
        %s231 = scalar_lea.vmem %s5, %s230
        %s232 = smul.u32 8, %s17
        %p233 = scmp.lt.s32.totalorder %s232, 15
        %s234 = scalar_select %p233, %s232, 15
        %s235 = smul.addr %s234, 3
        %s236 = smul.addr %s235, 4
        %s237 = scalar_lea.vmem %s0, %s236
        %s238 = smul.u32 8, %s17
        %p239 = scmp.lt.s32.totalorder %s17, 1
        %s240 = scalar_select %p239, %s17, 1
        %s241 = smul.addr %s240, 8
        %s242 = scalar_lea.vmem %s5, %s241
        %v244 = vld [vmem:[%s237] sm:$0xf]
        %v245 = vld [vmem:[%s237 + $0x4] sm:$0xf]
        %v246 = vld [vmem:[%s237 + $0x8] sm:$0xf]
        %v247 = vld [vmem:[%s237 + $0xc] sm:$0xf]
        %v248 = vld [vmem:[%s237 + $0x10] sm:$0xf]
        %v249 = vld [vmem:[%s237 + $0x14] sm:$0xf]
        %v250 = vld [vmem:[%s237 + $0x18] sm:$0xf]
        %v251 = vld [vmem:[%s237 + $0x1c] sm:$0xf]
        %v252 = vld [vmem:[%s237 + $0x20] sm:$0xf]
        %v253 = vld [vmem:[%s237 + $0x24] sm:$0xf]
        %v254 = vld [vmem:[%s237 + $0x28] sm:$0xf]
        %v255 = vld [vmem:[%s237 + $0x2c] sm:$0xf]
        %v256 = vld [vmem:[%s237 + $0x30] sm:$0xf]
        %v257 = vld [vmem:[%s237 + $0x34] sm:$0xf]
        %v258 = vld [vmem:[%s237 + $0x38] sm:$0xf]
        %v259 = vld [vmem:[%s237 + $0x3c] sm:$0xf]
        %v260 = vld [vmem:[%s237 + $0x40] sm:$0xf]
        %v261 = vld [vmem:[%s237 + $0x44] sm:$0xf]
        %v262 = vld [vmem:[%s237 + $0x48] sm:$0xf]
        %v263 = vld [vmem:[%s237 + $0x4c] sm:$0xf]
        %v264 = vld [vmem:[%s237 + $0x50] sm:$0xf]
        %v265 = vld [vmem:[%s237 + $0x54] sm:$0xf]
        %v266 = vld [vmem:[%s237 + $0x58] sm:$0xf]
        %v267 = vld [vmem:[%s237 + $0x5c] sm:$0xf]
        %v284 = vunpack.c.l.b16 %v244
        %v285 = vunpack.c.l.b16 %v245
        %v286 = vunpack.c.l.b16 %v247
        %v287 = vunpack.c.l.b16 %v248
        %v288 = vunpack.c.l.b16 %v250
        %v289 = vunpack.c.l.b16 %v251
        %v290 = vunpack.c.l.b16 %v253
        %v291 = vunpack.c.l.b16 %v254
        %v292 = vunpack.c.l.b16 %v256
        %v293 = vunpack.c.l.b16 %v257
        %v294 = vunpack.c.l.b16 %v259
        %v295 = vunpack.c.l.b16 %v260
        %v296 = vunpack.c.l.b16 %v262
        %v297 = vunpack.c.l.b16 %v263
        %v298 = vunpack.c.l.b16 %v265
        %v299 = vunpack.c.l.b16 %v266
        %v300 = vpack.c.b16 %v285, %v284
        %v301 = vpack.c.b16 %v287, %v286
        %v302 = vpack.c.b16 %v289, %v288
        %v303 = vpack.c.b16 %v291, %v290
        %v304 = vpack.c.b16 %v293, %v292
        %v305 = vpack.c.b16 %v295, %v294
        %v306 = vpack.c.b16 %v297, %v296
        %v307 = vpack.c.b16 %v299, %v298
        %v324 = vunpack.c.l.b16 %v246
        %v325 = vunpack.c.l.b16 %v249
        %v326 = vunpack.c.l.b16 %v252
        %v327 = vunpack.c.l.b16 %v255
        %v328 = vunpack.c.l.b16 %v258
        %v329 = vunpack.c.l.b16 %v261
        %v330 = vunpack.c.l.b16 %v264
        %v331 = vunpack.c.l.b16 %v267
        %v332 = vpack.c.b16 %v324, %v324
        %v333 = vpack.c.b16 %v325, %v325
        %v334 = vpack.c.b16 %v326, %v326
        %v335 = vpack.c.b16 %v327, %v327
        %v336 = vpack.c.b16 %v328, %v328
        %v337 = vpack.c.b16 %v329, %v329
        %v338 = vpack.c.b16 %v330, %v330
        %v339 = vpack.c.b16 %v331, %v331
        %vm340 = vsmask.f32 7424
        %v342 = vshrl.u32 %v300, 16
        %v344 = vshll.u32 %v300, 16
        %v346 = vrot.slane %v344, 1
        %v347 = vor.u32 %v342, %v346
        %v349 = vshll.u32 %v332, 16
        %v351 = vrot.slane %v349, 1
        %v352 = vsel %vm340, %v347, %v351
        %v354 = vshrl.u32 %v301, 16
        %v356 = vshll.u32 %v301, 16
        %v358 = vrot.slane %v356, 1
        %v359 = vor.u32 %v354, %v358
        %v361 = vshll.u32 %v333, 16
        %v363 = vrot.slane %v361, 1
        %v364 = vsel %vm340, %v359, %v363
        %v366 = vshrl.u32 %v302, 16
        %v368 = vshll.u32 %v302, 16
        %v370 = vrot.slane %v368, 1
        %v371 = vor.u32 %v366, %v370
        %v373 = vshll.u32 %v334, 16
        %v375 = vrot.slane %v373, 1
        %v376 = vsel %vm340, %v371, %v375
        %v378 = vshrl.u32 %v303, 16
        %v380 = vshll.u32 %v303, 16
        %v382 = vrot.slane %v380, 1
        %v383 = vor.u32 %v378, %v382
        %v385 = vshll.u32 %v335, 16
        %v387 = vrot.slane %v385, 1
        %v388 = vsel %vm340, %v383, %v387
        %v390 = vshrl.u32 %v304, 16
        %v392 = vshll.u32 %v304, 16
        %v394 = vrot.slane %v392, 1
        %v395 = vor.u32 %v390, %v394
        %v397 = vshll.u32 %v336, 16
        %v399 = vrot.slane %v397, 1
        %v400 = vsel %vm340, %v395, %v399
        %v402 = vshrl.u32 %v305, 16
        %v404 = vshll.u32 %v305, 16
        %v406 = vrot.slane %v404, 1
        %v407 = vor.u32 %v402, %v406
        %v409 = vshll.u32 %v337, 16
        %v411 = vrot.slane %v409, 1
        %v412 = vsel %vm340, %v407, %v411
        %v414 = vshrl.u32 %v306, 16
        %v416 = vshll.u32 %v306, 16
        %v418 = vrot.slane %v416, 1
        %v419 = vor.u32 %v414, %v418
        %v421 = vshll.u32 %v338, 16
        %v423 = vrot.slane %v421, 1
        %v424 = vsel %vm340, %v419, %v423
        %v426 = vshrl.u32 %v307, 16
        %v428 = vshll.u32 %v307, 16
        %v430 = vrot.slane %v428, 1
        %v431 = vor.u32 %v426, %v430
        %v433 = vshll.u32 %v339, 16
        %v435 = vrot.slane %v433, 1
        %v436 = vsel %vm340, %v431, %v435
        %vm445 = vcmask 1046528
        %v446 = vrot.slane %v300, 1
        %v447 = vrot.slane %v332, 1
        %v448 = vsel %vm445, %v446, %v447
        %v449 = vrot.slane %v301, 1
        %v450 = vrot.slane %v333, 1
        %v451 = vsel %vm445, %v449, %v450
        %v452 = vrot.slane %v302, 1
        %v453 = vrot.slane %v334, 1
        %v454 = vsel %vm445, %v452, %v453
        %v455 = vrot.slane %v303, 1
        %v456 = vrot.slane %v335, 1
        %v457 = vsel %vm445, %v455, %v456
        %v458 = vrot.slane %v304, 1
        %v459 = vrot.slane %v336, 1
        %v460 = vsel %vm445, %v458, %v459
        %v461 = vrot.slane %v305, 1
        %v462 = vrot.slane %v337, 1
        %v463 = vsel %vm445, %v461, %v462
        %v464 = vrot.slane %v306, 1
        %v465 = vrot.slane %v338, 1
        %v466 = vsel %vm445, %v464, %v465
        %v467 = vrot.slane %v307, 1
        %v468 = vrot.slane %v339, 1
        %v469 = vsel %vm445, %v467, %v468
        %vm478 = vsmask.f32 6400
        %v479 = vrot.slane %v342, 1
        %v480 = vrot.slane %v344, 2
        %v481 = vor.u32 %v479, %v480
        %v482 = vshrl.u32 %v332, 16
        %v484 = vrot.slane %v482, 1
        %v485 = vrot.slane %v349, 2
        %v486 = vor.u32 %v484, %v485
        %v487 = vsel %vm478, %v481, %v486
        %v488 = vrot.slane %v354, 1
        %v489 = vrot.slane %v356, 2
        %v490 = vor.u32 %v488, %v489
        %v491 = vshrl.u32 %v333, 16
        %v493 = vrot.slane %v491, 1
        %v494 = vrot.slane %v361, 2
        %v495 = vor.u32 %v493, %v494
        %v496 = vsel %vm478, %v490, %v495
        %v497 = vrot.slane %v366, 1
        %v498 = vrot.slane %v368, 2
        %v499 = vor.u32 %v497, %v498
        %v500 = vshrl.u32 %v334, 16
        %v502 = vrot.slane %v500, 1
        %v503 = vrot.slane %v373, 2
        %v504 = vor.u32 %v502, %v503
        %v505 = vsel %vm478, %v499, %v504
        %v506 = vrot.slane %v378, 1
        %v507 = vrot.slane %v380, 2
        %v508 = vor.u32 %v506, %v507
        %v509 = vshrl.u32 %v335, 16
        %v511 = vrot.slane %v509, 1
        %v512 = vrot.slane %v385, 2
        %v513 = vor.u32 %v511, %v512
        %v514 = vsel %vm478, %v508, %v513
        %v515 = vrot.slane %v390, 1
        %v516 = vrot.slane %v392, 2
        %v517 = vor.u32 %v515, %v516
        %v518 = vshrl.u32 %v336, 16
        %v520 = vrot.slane %v518, 1
        %v521 = vrot.slane %v397, 2
        %v522 = vor.u32 %v520, %v521
        %v523 = vsel %vm478, %v517, %v522
        %v524 = vrot.slane %v402, 1
        %v525 = vrot.slane %v404, 2
        %v526 = vor.u32 %v524, %v525
        %v527 = vshrl.u32 %v337, 16
        %v529 = vrot.slane %v527, 1
        %v530 = vrot.slane %v409, 2
        %v531 = vor.u32 %v529, %v530
        %v532 = vsel %vm478, %v526, %v531
        %v533 = vrot.slane %v414, 1
        %v534 = vrot.slane %v416, 2
        %v535 = vor.u32 %v533, %v534
        %v536 = vshrl.u32 %v338, 16
        %v538 = vrot.slane %v536, 1
        %v539 = vrot.slane %v421, 2
        %v540 = vor.u32 %v538, %v539
        %v541 = vsel %vm478, %v535, %v540
        %v542 = vrot.slane %v426, 1
        %v543 = vrot.slane %v428, 2
        %v544 = vor.u32 %v542, %v543
        %v545 = vshrl.u32 %v339, 16
        %v547 = vrot.slane %v545, 1
        %v548 = vrot.slane %v433, 2
        %v549 = vor.u32 %v547, %v548
        %v550 = vsel %vm478, %v544, %v549
        %vm559 = vcmask 1045504
        %v560 = vrot.slane %v300, 2
        %v561 = vrot.slane %v332, 2
        %v562 = vsel %vm559, %v560, %v561
        %v563 = vrot.slane %v301, 2
        %v564 = vrot.slane %v333, 2
        %v565 = vsel %vm559, %v563, %v564
        %v566 = vrot.slane %v302, 2
        %v567 = vrot.slane %v334, 2
        %v568 = vsel %vm559, %v566, %v567
        %v569 = vrot.slane %v303, 2
        %v570 = vrot.slane %v335, 2
        %v571 = vsel %vm559, %v569, %v570
        %v572 = vrot.slane %v304, 2
        %v573 = vrot.slane %v336, 2
        %v574 = vsel %vm559, %v572, %v573
        %v575 = vrot.slane %v305, 2
        %v576 = vrot.slane %v337, 2
        %v577 = vsel %vm559, %v575, %v576
        %v578 = vrot.slane %v306, 2
        %v579 = vrot.slane %v338, 2
        %v580 = vsel %vm559, %v578, %v579
        %v581 = vrot.slane %v307, 2
        %v582 = vrot.slane %v339, 2
        %v583 = vsel %vm559, %v581, %v582
        %v592 = vld [vmem:[#allocation2] sm:$0xff]
        %v593 = vld [vmem:[#allocation2 + $0x8] sm:$0xf]
        %v594 = vld [vmem:[#allocation2 + $0xc] sm:$0xff]
        %v595 = vld [vmem:[#allocation2 + $0x14] sm:$0xf]
        %v596 = vld [vmem:[#allocation2 + $0x18] sm:$0xff]
        %v597 = vld [vmem:[#allocation2 + $0x20] sm:$0xf]
        %v598 = vld [vmem:[#allocation2 + $0x24] sm:$0xff]
        %v599 = vld [vmem:[#allocation2 + $0x2c] sm:$0xf]
        %v600 = vld [vmem:[#allocation2 + $0x30] sm:$0xff]
        %v601 = vld [vmem:[#allocation2 + $0x38] sm:$0xf]
        %v602 = vld [vmem:[#allocation2 + $0x3c] sm:$0xff]
        %v603 = vld [vmem:[#allocation2 + $0x44] sm:$0xf]
        %v604 = vld [vmem:[#allocation2 + $0x48] sm:$0xff]
        %v605 = vld [vmem:[#allocation2 + $0x50] sm:$0xf]
        %v606 = vld [vmem:[#allocation2 + $0x54] sm:$0xff]
        %v607 = vld [vmem:[#allocation2 + $0x5c] sm:$0xf]
        %v608 = vld [vmem:[#allocation2 + $0x60] sm:$0xff]
        %v609 = vld [vmem:[#allocation2 + $0x68] sm:$0xf]
        %v610 = vld [vmem:[#allocation2 + $0x6c] sm:$0xff]
        %v611 = vld [vmem:[#allocation2 + $0x74] sm:$0xf]
        %v612 = vld [vmem:[#allocation2 + $0x78] sm:$0xff]
        %v613 = vld [vmem:[#allocation2 + $0x80] sm:$0xf]
        %v614 = vld [vmem:[#allocation2 + $0x84] sm:$0xff]
        %v615 = vld [vmem:[#allocation2 + $0x8c] sm:$0xf]
        %v616 = vld [vmem:[#allocation2 + $0x90] sm:$0xff]
        %v617 = vld [vmem:[#allocation2 + $0x98] sm:$0xf]
        %v618 = vld [vmem:[#allocation2 + $0x9c] sm:$0xff]
        %v619 = vld [vmem:[#allocation2 + $0xa4] sm:$0xf]
        %v620 = vld [vmem:[#allocation2 + $0xa8] sm:$0xff]
        %v621 = vld [vmem:[#allocation2 + $0xb0] sm:$0xf]
        %v622 = vld [vmem:[#allocation2 + $0xb4] sm:$0xff]
        %v623 = vld [vmem:[#allocation2 + $0xbc] sm:$0xf]
        %v624 = vld [vmem:[#allocation2 + $0xc0] sm:$0xff]
        %v625 = vld [vmem:[#allocation2 + $0xc8] sm:$0xf]
        %v626 = vld [vmem:[#allocation2 + $0xcc] sm:$0xff]
        %v627 = vld [vmem:[#allocation2 + $0xd4] sm:$0xf]
        %v628 = vld [vmem:[#allocation2 + $0xd8] sm:$0xff]
        %v629 = vld [vmem:[#allocation2 + $0xe0] sm:$0xf]
        %v630 = vld [vmem:[#allocation2 + $0xe4] sm:$0xff]
        %v631 = vld [vmem:[#allocation2 + $0xec] sm:$0xf]
        %v632 = vld [vmem:[#allocation2 + $0xf0] sm:$0xff]
        %v633 = vld [vmem:[#allocation2 + $0xf8] sm:$0xf]
        %v634 = vld [vmem:[#allocation2 + $0xfc] sm:$0xff]
        %v635 = vld [vmem:[#allocation2 + $0x104] sm:$0xf]
        %v636 = vld [vmem:[#allocation2 + $0x108] sm:$0xff]
        %v637 = vld [vmem:[#allocation2 + $0x110] sm:$0xf]
        %v638 = vld [vmem:[#allocation2 + $0x114] sm:$0xff]
        %v639 = vld [vmem:[#allocation2 + $0x11c] sm:$0xf]
        %v640 = vld [vmem:[#allocation2 + $0x120] sm:$0xff]
        %v641 = vld [vmem:[#allocation2 + $0x128] sm:$0xf]
        %v642 = vld [vmem:[#allocation2 + $0x12c] sm:$0xff]
        %v643 = vld [vmem:[#allocation2 + $0x134] sm:$0xf]
        %v644 = vld [vmem:[#allocation2 + $0x138] sm:$0xff]
        %v645 = vld [vmem:[#allocation2 + $0x140] sm:$0xf]
        %v646 = vld [vmem:[#allocation2 + $0x144] sm:$0xff]
        %v647 = vld [vmem:[#allocation2 + $0x14c] sm:$0xf]
        %v648 = vld [vmem:[#allocation2 + $0x150] sm:$0xff]
        %v649 = vld [vmem:[#allocation2 + $0x158] sm:$0xf]
        %v650 = vld [vmem:[#allocation2 + $0x15c] sm:$0xff]
        %v651 = vld [vmem:[#allocation2 + $0x164] sm:$0xf]
        %v652 = vld [vmem:[#allocation2 + $0x168] sm:$0xff]
        %v653 = vld [vmem:[#allocation2 + $0x170] sm:$0xf]
        %v654 = vld [vmem:[#allocation2 + $0x174] sm:$0xff]
        %v655 = vld [vmem:[#allocation2 + $0x17c] sm:$0xf]
        %v656 = vld [vmem:[#allocation2 + $0x180] sm:$0xff]
        %v657 = vld [vmem:[#allocation2 + $0x188] sm:$0xf]
        %v658 = vld [vmem:[#allocation2 + $0x18c] sm:$0xff]
        %v659 = vld [vmem:[#allocation2 + $0x194] sm:$0xf]
        %v660 = vld [vmem:[#allocation2 + $0x198] sm:$0xff]
        %v661 = vld [vmem:[#allocation2 + $0x1a0] sm:$0xf]
        %v662 = vld [vmem:[#allocation2 + $0x1a4] sm:$0xff]
        %v663 = vld [vmem:[#allocation2 + $0x1ac] sm:$0xf]
        %v664 = vld [vmem:[#allocation2 + $0x1b0] sm:$0xff]
        %v665 = vld [vmem:[#allocation2 + $0x1b8] sm:$0xf]
        %v666 = vld [vmem:[#allocation2 + $0x1bc] sm:$0xff]
        %v667 = vld [vmem:[#allocation2 + $0x1c4] sm:$0xf]
        %v668 = vld [vmem:[#allocation2 + $0x1c8] sm:$0xff]
        %v669 = vld [vmem:[#allocation2 + $0x1d0] sm:$0xf]
        %v670 = vld [vmem:[#allocation2 + $0x1d4] sm:$0xff]
        %v671 = vld [vmem:[#allocation2 + $0x1dc] sm:$0xf]
        %v672 = vld [vmem:[#allocation2 + $0x1e0] sm:$0xff]
        %v673 = vld [vmem:[#allocation2 + $0x1e8] sm:$0xf]
        %v674 = vld [vmem:[#allocation2 + $0x1ec] sm:$0xff]
        %v675 = vld [vmem:[#allocation2 + $0x1f4] sm:$0xf]
        %v676 = vld [vmem:[#allocation2 + $0x1f8] sm:$0xff]
        %v677 = vld [vmem:[#allocation2 + $0x200] sm:$0xf]
        %v678 = vld [vmem:[#allocation2 + $0x204] sm:$0xff]
        %v679 = vld [vmem:[#allocation2 + $0x20c] sm:$0xf]
        %v680 = vld [vmem:[#allocation2 + $0x210] sm:$0xff]
        %v681 = vld [vmem:[#allocation2 + $0x218] sm:$0xf]
        %v682 = vld [vmem:[#allocation2 + $0x21c] sm:$0xff]
        %v683 = vld [vmem:[#allocation2 + $0x224] sm:$0xf]
        %v684 = vld [vmem:[#allocation2 + $0x228] sm:$0xff]
        %v685 = vld [vmem:[#allocation2 + $0x230] sm:$0xf]
        %v686 = vld [vmem:[#allocation2 + $0x234] sm:$0xff]
        %v687 = vld [vmem:[#allocation2 + $0x23c] sm:$0xf]
        %v688 = vld [vmem:[#allocation2 + $0x240] sm:$0xff]
        %v689 = vld [vmem:[#allocation2 + $0x248] sm:$0xf]
        %v690 = vld [vmem:[#allocation2 + $0x24c] sm:$0xff]
        %v691 = vld [vmem:[#allocation2 + $0x254] sm:$0xf]
        %v692 = vld [vmem:[#allocation2 + $0x258] sm:$0xff]
        %v693 = vld [vmem:[#allocation2 + $0x260] sm:$0xf]
        %v694 = vld [vmem:[#allocation2 + $0x264] sm:$0xff]
        %v695 = vld [vmem:[#allocation2 + $0x26c] sm:$0xf]
        %v696 = vld [vmem:[#allocation2 + $0x270] sm:$0xff]
        %v697 = vld [vmem:[#allocation2 + $0x278] sm:$0xf]
        %v698 = vld [vmem:[#allocation2 + $0x27c] sm:$0xff]
        %v699 = vld [vmem:[#allocation2 + $0x284] sm:$0xf]
        %v700 = vld [vmem:[#allocation2 + $0x288] sm:$0xff]
        %v701 = vld [vmem:[#allocation2 + $0x290] sm:$0xf]
        %v702 = vld [vmem:[#allocation2 + $0x294] sm:$0xff]
        %v703 = vld [vmem:[#allocation2 + $0x29c] sm:$0xf]
        %v704 = vld [vmem:[#allocation2 + $0x2a0] sm:$0xff]
        %v705 = vld [vmem:[#allocation2 + $0x2a8] sm:$0xf]
        %v706 = vld [vmem:[#allocation2 + $0x2ac] sm:$0xff]
        %v707 = vld [vmem:[#allocation2 + $0x2b4] sm:$0xf]
        %v708 = vld [vmem:[#allocation2 + $0x2b8] sm:$0xff]
        %v709 = vld [vmem:[#allocation2 + $0x2c0] sm:$0xf]
        %v710 = vld [vmem:[#allocation2 + $0x2c4] sm:$0xff]
        %v711 = vld [vmem:[#allocation2 + $0x2cc] sm:$0xf]
        %v712 = vld [vmem:[#allocation2 + $0x2d0] sm:$0xff]
        %v713 = vld [vmem:[#allocation2 + $0x2d8] sm:$0xf]
        %v714 = vld [vmem:[#allocation2 + $0x2dc] sm:$0xff]
        %v715 = vld [vmem:[#allocation2 + $0x2e4] sm:$0xf]
        %v716 = vld [vmem:[#allocation2 + $0x2e8] sm:$0xff]
        %v717 = vld [vmem:[#allocation2 + $0x2f0] sm:$0xf]
        %v718 = vld [vmem:[#allocation2 + $0x2f4] sm:$0xff]
        %v719 = vld [vmem:[#allocation2 + $0x2fc] sm:$0xf]
        %v720 = vld [vmem:[#allocation2 + $0x300] sm:$0xff]
        %v721 = vld [vmem:[#allocation2 + $0x308] sm:$0xf]
        %v722 = vld [vmem:[#allocation2 + $0x30c] sm:$0xff]
        %v723 = vld [vmem:[#allocation2 + $0x314] sm:$0xf]
        %v724 = vld [vmem:[#allocation2 + $0x318] sm:$0xff]
        %v725 = vld [vmem:[#allocation2 + $0x320] sm:$0xf]
        %v726 = vld [vmem:[#allocation2 + $0x324] sm:$0xff]
        %v727 = vld [vmem:[#allocation2 + $0x32c] sm:$0xf]
        %v728 = vld [vmem:[#allocation2 + $0x330] sm:$0xff]
        %v729 = vld [vmem:[#allocation2 + $0x338] sm:$0xf]
        %v730 = vld [vmem:[#allocation2 + $0x33c] sm:$0xff]
        %v731 = vld [vmem:[#allocation2 + $0x344] sm:$0xf]
        %v732 = vld [vmem:[#allocation2 + $0x348] sm:$0xff]
        %v733 = vld [vmem:[#allocation2 + $0x350] sm:$0xf]
        %v734 = vld [vmem:[#allocation2 + $0x354] sm:$0xff]
        %v735 = vld [vmem:[#allocation2 + $0x35c] sm:$0xf]
        %v736 = vld [vmem:[#allocation2 + $0x360] sm:$0xff]
        %v737 = vld [vmem:[#allocation2 + $0x368] sm:$0xf]
        %v738 = vld [vmem:[#allocation2 + $0x36c] sm:$0xff]
        %v739 = vld [vmem:[#allocation2 + $0x374] sm:$0xf]
        %v740 = vld [vmem:[#allocation2 + $0x378] sm:$0xff]
        %v741 = vld [vmem:[#allocation2 + $0x380] sm:$0xf]
        %v742 = vld [vmem:[#allocation2 + $0x384] sm:$0xff]
        %v743 = vld [vmem:[#allocation2 + $0x38c] sm:$0xf]
        %v744 = vld [vmem:[#allocation2 + $0x390] sm:$0xff]
        %v745 = vld [vmem:[#allocation2 + $0x398] sm:$0xf]
        %v746 = vld [vmem:[#allocation2 + $0x39c] sm:$0xff]
        %v747 = vld [vmem:[#allocation2 + $0x3a4] sm:$0xf]
        %v748 = vld [vmem:[#allocation2 + $0x3a8] sm:$0xff]
        %v749 = vld [vmem:[#allocation2 + $0x3b0] sm:$0xf]
        %v750 = vld [vmem:[#allocation2 + $0x3b4] sm:$0xff]
        %v751 = vld [vmem:[#allocation2 + $0x3bc] sm:$0xf]
        %v912 = vunpack.c.l.b16 %v592
        %v913 = vunpack.c.h.b16 %v592
        %v914 = vunpack.c.l.b16 %v593
        %v915 = vunpack.c.l.b16 %v594
        %v916 = vunpack.c.h.b16 %v594
        %v917 = vunpack.c.l.b16 %v595
        %v918 = vunpack.c.l.b16 %v596
        %v919 = vunpack.c.h.b16 %v596
        %v920 = vunpack.c.l.b16 %v597
        %v921 = vunpack.c.l.b16 %v598
        %v922 = vunpack.c.h.b16 %v598
        %v923 = vunpack.c.l.b16 %v599
        %v924 = vunpack.c.l.b16 %v600
        %v925 = vunpack.c.h.b16 %v600
        %v926 = vunpack.c.l.b16 %v601
        %v927 = vunpack.c.l.b16 %v602
        %v928 = vunpack.c.h.b16 %v602
        %v929 = vunpack.c.l.b16 %v603
        %v930 = vunpack.c.l.b16 %v604
        %v931 = vunpack.c.h.b16 %v604
        %v932 = vunpack.c.l.b16 %v605
        %v933 = vunpack.c.l.b16 %v606
        %v934 = vunpack.c.h.b16 %v606
        %v935 = vunpack.c.l.b16 %v607
        %v936 = vunpack.c.l.b16 %v608
        %v937 = vunpack.c.h.b16 %v608
        %v938 = vunpack.c.l.b16 %v609
        %v939 = vunpack.c.l.b16 %v610
        %v940 = vunpack.c.h.b16 %v610
        %v941 = vunpack.c.l.b16 %v611
        %v942 = vunpack.c.l.b16 %v612
        %v943 = vunpack.c.h.b16 %v612
        %v944 = vunpack.c.l.b16 %v613
        %v945 = vunpack.c.l.b16 %v614
        %v946 = vunpack.c.h.b16 %v614
        %v947 = vunpack.c.l.b16 %v615
        %v948 = vunpack.c.l.b16 %v616
        %v949 = vunpack.c.h.b16 %v616
        %v950 = vunpack.c.l.b16 %v617
        %v951 = vunpack.c.l.b16 %v618
        %v952 = vunpack.c.h.b16 %v618
        %v953 = vunpack.c.l.b16 %v619
        %v954 = vunpack.c.l.b16 %v620
        %v955 = vunpack.c.h.b16 %v620
        %v956 = vunpack.c.l.b16 %v621
        %v957 = vunpack.c.l.b16 %v622
        %v958 = vunpack.c.h.b16 %v622
        %v959 = vunpack.c.l.b16 %v623
        %v960 = vunpack.c.l.b16 %v624
        %v961 = vunpack.c.h.b16 %v624
        %v962 = vunpack.c.l.b16 %v625
        %v963 = vunpack.c.l.b16 %v626
        %v964 = vunpack.c.h.b16 %v626
        %v965 = vunpack.c.l.b16 %v627
        %v966 = vunpack.c.l.b16 %v628
        %v967 = vunpack.c.h.b16 %v628
        %v968 = vunpack.c.l.b16 %v629
        %v969 = vunpack.c.l.b16 %v630
        %v970 = vunpack.c.h.b16 %v630
        %v971 = vunpack.c.l.b16 %v631
        %v972 = vunpack.c.l.b16 %v632
        %v973 = vunpack.c.h.b16 %v632
        %v974 = vunpack.c.l.b16 %v633
        %v975 = vunpack.c.l.b16 %v634
        %v976 = vunpack.c.h.b16 %v634
        %v977 = vunpack.c.l.b16 %v635
        %v978 = vunpack.c.l.b16 %v636
        %v979 = vunpack.c.h.b16 %v636
        %v980 = vunpack.c.l.b16 %v637
        %v981 = vunpack.c.l.b16 %v638
        %v982 = vunpack.c.h.b16 %v638
        %v983 = vunpack.c.l.b16 %v639
        %v984 = vunpack.c.l.b16 %v640
        %v985 = vunpack.c.h.b16 %v640
        %v986 = vunpack.c.l.b16 %v641
        %v987 = vunpack.c.l.b16 %v642
        %v988 = vunpack.c.h.b16 %v642
        %v989 = vunpack.c.l.b16 %v643
        %v990 = vunpack.c.l.b16 %v644
        %v991 = vunpack.c.h.b16 %v644
        %v992 = vunpack.c.l.b16 %v645
        %v993 = vunpack.c.l.b16 %v646
        %v994 = vunpack.c.h.b16 %v646
        %v995 = vunpack.c.l.b16 %v647
        %v996 = vunpack.c.l.b16 %v648
        %v997 = vunpack.c.h.b16 %v648
        %v998 = vunpack.c.l.b16 %v649
        %v999 = vunpack.c.l.b16 %v650
        %v1000 = vunpack.c.h.b16 %v650
        %v1001 = vunpack.c.l.b16 %v651
        %v1002 = vunpack.c.l.b16 %v652
        %v1003 = vunpack.c.h.b16 %v652
        %v1004 = vunpack.c.l.b16 %v653
        %v1005 = vunpack.c.l.b16 %v654
        %v1006 = vunpack.c.h.b16 %v654
        %v1007 = vunpack.c.l.b16 %v655
        %v1008 = vunpack.c.l.b16 %v656
        %v1009 = vunpack.c.h.b16 %v656
        %v1010 = vunpack.c.l.b16 %v657
        %v1011 = vunpack.c.l.b16 %v658
        %v1012 = vunpack.c.h.b16 %v658
        %v1013 = vunpack.c.l.b16 %v659
        %v1014 = vunpack.c.l.b16 %v660
        %v1015 = vunpack.c.h.b16 %v660
        %v1016 = vunpack.c.l.b16 %v661
        %v1017 = vunpack.c.l.b16 %v662
        %v1018 = vunpack.c.h.b16 %v662
        %v1019 = vunpack.c.l.b16 %v663
        %v1020 = vunpack.c.l.b16 %v664
        %v1021 = vunpack.c.h.b16 %v664
        %v1022 = vunpack.c.l.b16 %v665
        %v1023 = vunpack.c.l.b16 %v666
        %v1024 = vunpack.c.h.b16 %v666
        %v1025 = vunpack.c.l.b16 %v667
        %v1026 = vunpack.c.l.b16 %v668
        %v1027 = vunpack.c.h.b16 %v668
        %v1028 = vunpack.c.l.b16 %v669
        %v1029 = vunpack.c.l.b16 %v670
        %v1030 = vunpack.c.h.b16 %v670
        %v1031 = vunpack.c.l.b16 %v671
        %v1032 = vunpack.c.l.b16 %v672
        %v1033 = vunpack.c.h.b16 %v672
        %v1034 = vunpack.c.l.b16 %v673
        %v1035 = vunpack.c.l.b16 %v674
        %v1036 = vunpack.c.h.b16 %v674
        %v1037 = vunpack.c.l.b16 %v675
        %v1038 = vunpack.c.l.b16 %v676
        %v1039 = vunpack.c.h.b16 %v676
        %v1040 = vunpack.c.l.b16 %v677
        %v1041 = vunpack.c.l.b16 %v678
        %v1042 = vunpack.c.h.b16 %v678
        %v1043 = vunpack.c.l.b16 %v679
        %v1044 = vunpack.c.l.b16 %v680
        %v1045 = vunpack.c.h.b16 %v680
        %v1046 = vunpack.c.l.b16 %v681
        %v1047 = vunpack.c.l.b16 %v682
        %v1048 = vunpack.c.h.b16 %v682
        %v1049 = vunpack.c.l.b16 %v683
        %v1050 = vunpack.c.l.b16 %v684
        %v1051 = vunpack.c.h.b16 %v684
        %v1052 = vunpack.c.l.b16 %v685
        %v1053 = vunpack.c.l.b16 %v686
        %v1054 = vunpack.c.h.b16 %v686
        %v1055 = vunpack.c.l.b16 %v687
        %v1056 = vunpack.c.l.b16 %v688
        %v1057 = vunpack.c.h.b16 %v688
        %v1058 = vunpack.c.l.b16 %v689
        %v1059 = vunpack.c.l.b16 %v690
        %v1060 = vunpack.c.h.b16 %v690
        %v1061 = vunpack.c.l.b16 %v691
        %v1062 = vunpack.c.l.b16 %v692
        %v1063 = vunpack.c.h.b16 %v692
        %v1064 = vunpack.c.l.b16 %v693
        %v1065 = vunpack.c.l.b16 %v694
        %v1066 = vunpack.c.h.b16 %v694
        %v1067 = vunpack.c.l.b16 %v695
        %v1068 = vunpack.c.l.b16 %v696
        %v1069 = vunpack.c.h.b16 %v696
        %v1070 = vunpack.c.l.b16 %v697
        %v1071 = vunpack.c.l.b16 %v698
        %v1072 = vunpack.c.h.b16 %v698
        %v1073 = vunpack.c.l.b16 %v699
        %v1074 = vunpack.c.l.b16 %v700
        %v1075 = vunpack.c.h.b16 %v700
        %v1076 = vunpack.c.l.b16 %v701
        %v1077 = vunpack.c.l.b16 %v702
        %v1078 = vunpack.c.h.b16 %v702
        %v1079 = vunpack.c.l.b16 %v703
        %v1080 = vunpack.c.l.b16 %v704
        %v1081 = vunpack.c.h.b16 %v704
        %v1082 = vunpack.c.l.b16 %v705
        %v1083 = vunpack.c.l.b16 %v706
        %v1084 = vunpack.c.h.b16 %v706
        %v1085 = vunpack.c.l.b16 %v707
        %v1086 = vunpack.c.l.b16 %v708
        %v1087 = vunpack.c.h.b16 %v708
        %v1088 = vunpack.c.l.b16 %v709
        %v1089 = vunpack.c.l.b16 %v710
        %v1090 = vunpack.c.h.b16 %v710
        %v1091 = vunpack.c.l.b16 %v711
        %v1092 = vunpack.c.l.b16 %v712
        %v1093 = vunpack.c.h.b16 %v712
        %v1094 = vunpack.c.l.b16 %v713
        %v1095 = vunpack.c.l.b16 %v714
        %v1096 = vunpack.c.h.b16 %v714
        %v1097 = vunpack.c.l.b16 %v715
        %v1098 = vunpack.c.l.b16 %v716
        %v1099 = vunpack.c.h.b16 %v716
        %v1100 = vunpack.c.l.b16 %v717
        %v1101 = vunpack.c.l.b16 %v718
        %v1102 = vunpack.c.h.b16 %v718
        %v1103 = vunpack.c.l.b16 %v719
        %v1104 = vunpack.c.l.b16 %v720
        %v1105 = vunpack.c.h.b16 %v720
        %v1106 = vunpack.c.l.b16 %v721
        %v1107 = vunpack.c.l.b16 %v722
        %v1108 = vunpack.c.h.b16 %v722
        %v1109 = vunpack.c.l.b16 %v723
        %v1110 = vunpack.c.l.b16 %v724
        %v1111 = vunpack.c.h.b16 %v724
        %v1112 = vunpack.c.l.b16 %v725
        %v1113 = vunpack.c.l.b16 %v726
        %v1114 = vunpack.c.h.b16 %v726
        %v1115 = vunpack.c.l.b16 %v727
        %v1116 = vunpack.c.l.b16 %v728
        %v1117 = vunpack.c.h.b16 %v728
        %v1118 = vunpack.c.l.b16 %v729
        %v1119 = vunpack.c.l.b16 %v730
        %v1120 = vunpack.c.h.b16 %v730
        %v1121 = vunpack.c.l.b16 %v731
        %v1122 = vunpack.c.l.b16 %v732
        %v1123 = vunpack.c.h.b16 %v732
        %v1124 = vunpack.c.l.b16 %v733
        %v1125 = vunpack.c.l.b16 %v734
        %v1126 = vunpack.c.h.b16 %v734
        %v1127 = vunpack.c.l.b16 %v735
        %v1128 = vunpack.c.l.b16 %v736
        %v1129 = vunpack.c.h.b16 %v736
        %v1130 = vunpack.c.l.b16 %v737
        %v1131 = vunpack.c.l.b16 %v738
        %v1132 = vunpack.c.h.b16 %v738
        %v1133 = vunpack.c.l.b16 %v739
        %v1134 = vunpack.c.l.b16 %v740
        %v1135 = vunpack.c.h.b16 %v740
        %v1136 = vunpack.c.l.b16 %v741
        %v1137 = vunpack.c.l.b16 %v742
        %v1138 = vunpack.c.h.b16 %v742
        %v1139 = vunpack.c.l.b16 %v743
        %v1140 = vunpack.c.l.b16 %v744
        %v1141 = vunpack.c.h.b16 %v744
        %v1142 = vunpack.c.l.b16 %v745
        %v1143 = vunpack.c.l.b16 %v746
        %v1144 = vunpack.c.h.b16 %v746
        %v1145 = vunpack.c.l.b16 %v747
        %v1146 = vunpack.c.l.b16 %v748
        %v1147 = vunpack.c.h.b16 %v748
        %v1148 = vunpack.c.l.b16 %v749
        %v1149 = vunpack.c.l.b16 %v750
        %v1150 = vunpack.c.h.b16 %v750
        %v1151 = vunpack.c.l.b16 %v751
        %v1152 = vpack.c.b16 %v915, %v912
        %v1153 = vpack.c.b16 %v916, %v913
        %v1154 = vpack.c.b16 %v917, %v914
        %v1155 = vpack.c.b16 %v921, %v918
        %v1156 = vpack.c.b16 %v922, %v919
        %v1157 = vpack.c.b16 %v923, %v920
        %v1158 = vpack.c.b16 %v927, %v924
        %v1159 = vpack.c.b16 %v928, %v925
        %v1160 = vpack.c.b16 %v929, %v926
        %v1161 = vpack.c.b16 %v933, %v930
        %v1162 = vpack.c.b16 %v934, %v931
        %v1163 = vpack.c.b16 %v935, %v932
        %v1164 = vpack.c.b16 %v939, %v936
        %v1165 = vpack.c.b16 %v940, %v937
        %v1166 = vpack.c.b16 %v941, %v938
        %v1167 = vpack.c.b16 %v945, %v942
        %v1168 = vpack.c.b16 %v946, %v943
        %v1169 = vpack.c.b16 %v947, %v944
        %v1170 = vpack.c.b16 %v951, %v948
        %v1171 = vpack.c.b16 %v952, %v949
        %v1172 = vpack.c.b16 %v953, %v950
        %v1173 = vpack.c.b16 %v957, %v954
        %v1174 = vpack.c.b16 %v958, %v955
        %v1175 = vpack.c.b16 %v959, %v956
        %v1176 = vpack.c.b16 %v963, %v960
        %v1177 = vpack.c.b16 %v964, %v961
        %v1178 = vpack.c.b16 %v965, %v962
        %v1179 = vpack.c.b16 %v969, %v966
        %v1180 = vpack.c.b16 %v970, %v967
        %v1181 = vpack.c.b16 %v971, %v968
        %v1182 = vpack.c.b16 %v975, %v972
        %v1183 = vpack.c.b16 %v976, %v973
        %v1184 = vpack.c.b16 %v977, %v974
        %v1185 = vpack.c.b16 %v981, %v978
        %v1186 = vpack.c.b16 %v982, %v979
        %v1187 = vpack.c.b16 %v983, %v980
        %v1188 = vpack.c.b16 %v987, %v984
        %v1189 = vpack.c.b16 %v988, %v985
        %v1190 = vpack.c.b16 %v989, %v986
        %v1191 = vpack.c.b16 %v993, %v990
        %v1192 = vpack.c.b16 %v994, %v991
        %v1193 = vpack.c.b16 %v995, %v992
        %v1194 = vpack.c.b16 %v999, %v996
        %v1195 = vpack.c.b16 %v1000, %v997
        %v1196 = vpack.c.b16 %v1001, %v998
        %v1197 = vpack.c.b16 %v1005, %v1002
        %v1198 = vpack.c.b16 %v1006, %v1003
        %v1199 = vpack.c.b16 %v1007, %v1004
        %v1200 = vpack.c.b16 %v1011, %v1008
        %v1201 = vpack.c.b16 %v1012, %v1009
        %v1202 = vpack.c.b16 %v1013, %v1010
        %v1203 = vpack.c.b16 %v1017, %v1014
        %v1204 = vpack.c.b16 %v1018, %v1015
        %v1205 = vpack.c.b16 %v1019, %v1016
        %v1206 = vpack.c.b16 %v1023, %v1020
        %v1207 = vpack.c.b16 %v1024, %v1021
        %v1208 = vpack.c.b16 %v1025, %v1022
        %v1209 = vpack.c.b16 %v1029, %v1026
        %v1210 = vpack.c.b16 %v1030, %v1027
        %v1211 = vpack.c.b16 %v1031, %v1028
        %v1212 = vpack.c.b16 %v1035, %v1032
        %v1213 = vpack.c.b16 %v1036, %v1033
        %v1214 = vpack.c.b16 %v1037, %v1034
        %v1215 = vpack.c.b16 %v1041, %v1038
        %v1216 = vpack.c.b16 %v1042, %v1039
        %v1217 = vpack.c.b16 %v1043, %v1040
        %v1218 = vpack.c.b16 %v1047, %v1044
        %v1219 = vpack.c.b16 %v1048, %v1045
        %v1220 = vpack.c.b16 %v1049, %v1046
        %v1221 = vpack.c.b16 %v1053, %v1050
        %v1222 = vpack.c.b16 %v1054, %v1051
        %v1223 = vpack.c.b16 %v1055, %v1052
        %v1224 = vpack.c.b16 %v1059, %v1056
        %v1225 = vpack.c.b16 %v1060, %v1057
        %v1226 = vpack.c.b16 %v1061, %v1058
        %v1227 = vpack.c.b16 %v1065, %v1062
        %v1228 = vpack.c.b16 %v1066, %v1063
        %v1229 = vpack.c.b16 %v1067, %v1064
        %v1230 = vpack.c.b16 %v1071, %v1068
        %v1231 = vpack.c.b16 %v1072, %v1069
        %v1232 = vpack.c.b16 %v1073, %v1070
        %v1233 = vpack.c.b16 %v1077, %v1074
        %v1234 = vpack.c.b16 %v1078, %v1075
        %v1235 = vpack.c.b16 %v1079, %v1076
        %v1236 = vpack.c.b16 %v1083, %v1080
        %v1237 = vpack.c.b16 %v1084, %v1081
        %v1238 = vpack.c.b16 %v1085, %v1082
        %v1239 = vpack.c.b16 %v1089, %v1086
        %v1240 = vpack.c.b16 %v1090, %v1087
        %v1241 = vpack.c.b16 %v1091, %v1088
        %v1242 = vpack.c.b16 %v1095, %v1092
        %v1243 = vpack.c.b16 %v1096, %v1093
        %v1244 = vpack.c.b16 %v1097, %v1094
        %v1245 = vpack.c.b16 %v1101, %v1098
        %v1246 = vpack.c.b16 %v1102, %v1099
        %v1247 = vpack.c.b16 %v1103, %v1100
        %v1248 = vpack.c.b16 %v1107, %v1104
        %v1249 = vpack.c.b16 %v1108, %v1105
        %v1250 = vpack.c.b16 %v1109, %v1106
        %v1251 = vpack.c.b16 %v1113, %v1110
        %v1252 = vpack.c.b16 %v1114, %v1111
        %v1253 = vpack.c.b16 %v1115, %v1112
        %v1254 = vpack.c.b16 %v1119, %v1116
        %v1255 = vpack.c.b16 %v1120, %v1117
        %v1256 = vpack.c.b16 %v1121, %v1118
        %v1257 = vpack.c.b16 %v1125, %v1122
        %v1258 = vpack.c.b16 %v1126, %v1123
        %v1259 = vpack.c.b16 %v1127, %v1124
        %v1260 = vpack.c.b16 %v1131, %v1128
        %v1261 = vpack.c.b16 %v1132, %v1129
        %v1262 = vpack.c.b16 %v1133, %v1130
        %v1263 = vpack.c.b16 %v1137, %v1134
        %v1264 = vpack.c.b16 %v1138, %v1135
        %v1265 = vpack.c.b16 %v1139, %v1136
        %v1266 = vpack.c.b16 %v1143, %v1140
        %v1267 = vpack.c.b16 %v1144, %v1141
        %v1268 = vpack.c.b16 %v1145, %v1142
        %v1269 = vpack.c.b16 %v1149, %v1146
        %v1270 = vpack.c.b16 %v1150, %v1147
        %v1271 = vpack.c.b16 %v1151, %v1148
        %1392 = vmatprep.subr.bf16.mxu0 %v1153
        %1393 = vmatpush1.bf16.msra.mxu0 %v1152
        %1394 = vmatprep.subr.bf16.mxu0 %v1156
        %1395 = vmatpush1.bf16.msra.mxu0 %v1155
        %1396 = vmatprep.subr.bf16.mxu0 %v1159
        %1397 = vmatpush1.bf16.msra.mxu0 %v1158
        %1398 = vmatprep.subr.bf16.mxu0 %v1162
        %1399 = vmatpush1.bf16.msra.mxu0 %v1161
        %1400 = vmatprep.subr.bf16.mxu0 %v1165
        %1401 = vmatpush1.bf16.msra.mxu0 %v1164
        %1402 = vmatprep.subr.bf16.mxu0 %v1168
        %1403 = vmatpush1.bf16.msra.mxu0 %v1167
        %1404 = vmatprep.subr.bf16.mxu0 %v1171
        %1405 = vmatpush1.bf16.msra.mxu0 %v1170
        %1406 = vmatprep.subr.bf16.mxu0 %v1174
        %1407 = vmatpush1.bf16.msra.mxu0 %v1173
        %1408 = vmatprep.subr.bf16.mxu0 %v1177
        %1409 = vmatpush1.bf16.msra.mxu0 %v1176
        %1410 = vmatprep.subr.bf16.mxu0 %v1180
        %1411 = vmatpush1.bf16.msra.mxu0 %v1179
        %1412 = vmatprep.subr.bf16.mxu0 %v1183
        %1413 = vmatpush1.bf16.msra.mxu0 %v1182
        %1414 = vmatprep.subr.bf16.mxu0 %v1186
        %1415 = vmatpush1.bf16.msra.mxu0 %v1185
        %1416 = vmatprep.subr.bf16.mxu0 %v1189
        %1417 = vmatpush1.bf16.msra.mxu0 %v1188
        %1418 = vmatprep.subr.bf16.mxu0 %v1192
        %1419 = vmatpush1.bf16.msra.mxu0 %v1191
        %1420 = vmatprep.subr.bf16.mxu0 %v1195
        %1421 = vmatpush1.bf16.msra.mxu0 %v1194
        %1422 = vmatprep.subr.bf16.mxu0 %v1198
        %1423 = vmatpush1.bf16.msra.mxu0 %v1197
        %1424 = vmatprep.mubr.bf16.mxu0 %v352
        %1425 = vmatmul.mubr.bf16.gmra.mrb[0].mxu0 %v300
        %v1426 = vpop.f32.mrb[0].mxu0
        %v1427 = vadd.f32 0.0, %v1426
        %v1428 = vpop.f32.mrb[0].mxu0
        %v1429 = vadd.f32 0.0, %v1428
        %v1430 = vpop.f32.mrb[0].mxu0
        %v1431 = vadd.f32 0.0, %v1430
        %v1432 = vpop.f32.mrb[0].mxu0
        %v1433 = vadd.f32 0.0, %v1432
        %1434 = vmatprep.mubr.bf16.mxu0 %v364
        %1435 = vmatmul.mubr.bf16.gmra.mrb[0].mxu0 %v301
        %v1436 = vpop.f32.mrb[0].mxu0
        %v1437 = vadd.f32 0.0, %v1436
        %v1438 = vpop.f32.mrb[0].mxu0
        %v1439 = vadd.f32 0.0, %v1438
        %v1440 = vpop.f32.mrb[0].mxu0
        %v1441 = vadd.f32 0.0, %v1440
        %v1442 = vpop.f32.mrb[0].mxu0
        %v1443 = vadd.f32 0.0, %v1442
        %1444 = vmatprep.mubr.bf16.mxu0 %v376
        %1445 = vmatmul.mubr.bf16.gmra.mrb[0].mxu0 %v302
        %v1446 = vpop.f32.mrb[0].mxu0
        %v1447 = vadd.f32 0.0, %v1446
        %v1448 = vpop.f32.mrb[0].mxu0
        %v1449 = vadd.f32 0.0, %v1448
        %v1450 = vpop.f32.mrb[0].mxu0
        %v1451 = vadd.f32 0.0, %v1450
        %v1452 = vpop.f32.mrb[0].mxu0
        %v1453 = vadd.f32 0.0, %v1452
        %1454 = vmatprep.mubr.bf16.mxu0 %v388
        %1455 = vmatmul.mubr.bf16.gmra.mrb[0].mxu0 %v303
        %v1456 = vpop.f32.mrb[0].mxu0
        %v1457 = vadd.f32 0.0, %v1456
        %v1458 = vpop.f32.mrb[0].mxu0
        %v1459 = vadd.f32 0.0, %v1458
        %v1460 = vpop.f32.mrb[0].mxu0
        %v1461 = vadd.f32 0.0, %v1460
        %v1462 = vpop.f32.mrb[0].mxu0
        %v1463 = vadd.f32 0.0, %v1462
        %1464 = vmatprep.mubr.bf16.mxu0 %v400
        %1465 = vmatmul.mubr.bf16.gmra.mrb[0].mxu0 %v304
        %v1466 = vpop.f32.mrb[0].mxu0
        %v1467 = vadd.f32 0.0, %v1466
        %v1468 = vpop.f32.mrb[0].mxu0
        %v1469 = vadd.f32 0.0, %v1468
        %v1470 = vpop.f32.mrb[0].mxu0
        %v1471 = vadd.f32 0.0, %v1470
        %v1472 = vpop.f32.mrb[0].mxu0
        %v1473 = vadd.f32 0.0, %v1472
        %1474 = vmatprep.mubr.bf16.mxu0 %v412
        %1475 = vmatmul.mubr.bf16.gmra.mrb[0].mxu0 %v305
        %v1476 = vpop.f32.mrb[0].mxu0
        %v1477 = vadd.f32 0.0, %v1476
        %v1478 = vpop.f32.mrb[0].mxu0
        %v1479 = vadd.f32 0.0, %v1478
        %v1480 = vpop.f32.mrb[0].mxu0
        %v1481 = vadd.f32 0.0, %v1480
        %v1482 = vpop.f32.mrb[0].mxu0
        %v1483 = vadd.f32 0.0, %v1482
        %1484 = vmatprep.mubr.bf16.mxu0 %v424
        %1485 = vmatmul.mubr.bf16.gmra.mrb[0].mxu0 %v306
        %v1486 = vpop.f32.mrb[0].mxu0
        %v1487 = vadd.f32 0.0, %v1486
        %v1488 = vpop.f32.mrb[0].mxu0
        %v1489 = vadd.f32 0.0, %v1488
        %v1490 = vpop.f32.mrb[0].mxu0
        %v1491 = vadd.f32 0.0, %v1490
        %v1492 = vpop.f32.mrb[0].mxu0
        %v1493 = vadd.f32 0.0, %v1492
        %1494 = vmatprep.mubr.bf16.mxu0 %v436
        %1495 = vmatmul.mubr.bf16.gmra.mrb[0].mxu0 %v307
        %v1496 = vpop.f32.mrb[0].mxu0
        %v1497 = vadd.f32 0.0, %v1496
        %v1498 = vpop.f32.mrb[0].mxu0
        %v1499 = vadd.f32 0.0, %v1498
        %v1500 = vpop.f32.mrb[0].mxu0
        %v1501 = vadd.f32 0.0, %v1500
        %v1502 = vpop.f32.mrb[0].mxu0
        %v1503 = vadd.f32 0.0, %v1502
        %1504 = vdwg.mxu0
        %1505 = vmatprep.subr.bf16.mxu0 %v1201
        %1506 = vmatpush1.bf16.msra.mxu0 %v1200
        %1507 = vmatprep.subr.bf16.mxu0 %v1204
        %1508 = vmatpush1.bf16.msra.mxu0 %v1203
        %1509 = vmatprep.subr.bf16.mxu0 %v1207
        %1510 = vmatpush1.bf16.msra.mxu0 %v1206
        %1511 = vmatprep.subr.bf16.mxu0 %v1210
        %1512 = vmatpush1.bf16.msra.mxu0 %v1209
        %1513 = vmatprep.subr.bf16.mxu0 %v1213
        %1514 = vmatpush1.bf16.msra.mxu0 %v1212
        %1515 = vmatprep.subr.bf16.mxu0 %v1216
        %1516 = vmatpush1.bf16.msra.mxu0 %v1215
        %1517 = vmatprep.subr.bf16.mxu0 %v1219
        %1518 = vmatpush1.bf16.msra.mxu0 %v1218
        %1519 = vmatprep.subr.bf16.mxu0 %v1222
        %1520 = vmatpush1.bf16.msra.mxu0 %v1221
        %1521 = vmatprep.subr.bf16.mxu0 %v1225
        %1522 = vmatpush1.bf16.msra.mxu0 %v1224
        %1523 = vmatprep.subr.bf16.mxu0 %v1228
        %1524 = vmatpush1.bf16.msra.mxu0 %v1227
        %1525 = vmatprep.subr.bf16.mxu0 %v1231
        %1526 = vmatpush1.bf16.msra.mxu0 %v1230
        %1527 = vmatprep.subr.bf16.mxu0 %v1234
        %1528 = vmatpush1.bf16.msra.mxu0 %v1233
        %1529 = vmatprep.subr.bf16.mxu0 %v1237
        %1530 = vmatpush1.bf16.msra.mxu0 %v1236
        %1531 = vmatprep.subr.bf16.mxu0 %v1240
        %1532 = vmatpush1.bf16.msra.mxu0 %v1239
        %1533 = vmatprep.subr.bf16.mxu0 %v1243
        %1534 = vmatpush1.bf16.msra.mxu0 %v1242
        %1535 = vmatprep.subr.bf16.mxu0 %v1246
        %1536 = vmatpush1.bf16.msra.mxu0 %v1245
        %1537 = vmatprep.mubr.bf16.mxu0 %v487
        %1538 = vmatmul.mubr.bf16.gmra.mrb[0].mxu0 %v448
        %v1539 = vpop.f32.mrb[0].mxu0
        %v1540 = vadd.f32 %v1427, %v1539
        %v1541 = vpop.f32.mrb[0].mxu0
        %v1542 = vadd.f32 %v1429, %v1541
        %v1543 = vpop.f32.mrb[0].mxu0
        %v1544 = vadd.f32 %v1431, %v1543
        %v1545 = vpop.f32.mrb[0].mxu0
        %v1546 = vadd.f32 %v1433, %v1545
        %1547 = vmatprep.mubr.bf16.mxu0 %v496
        %1548 = vmatmul.mubr.bf16.gmra.mrb[0].mxu0 %v451
        %v1549 = vpop.f32.mrb[0].mxu0
        %v1550 = vadd.f32 %v1437, %v1549
        %v1551 = vpop.f32.mrb[0].mxu0
        %v1552 = vadd.f32 %v1439, %v1551
        %v1553 = vpop.f32.mrb[0].mxu0
        %v1554 = vadd.f32 %v1441, %v1553
        %v1555 = vpop.f32.mrb[0].mxu0
        %v1556 = vadd.f32 %v1443, %v1555
        %1557 = vmatprep.mubr.bf16.mxu0 %v505
        %1558 = vmatmul.mubr.bf16.gmra.mrb[0].mxu0 %v454
        %v1559 = vpop.f32.mrb[0].mxu0
        %v1560 = vadd.f32 %v1447, %v1559
        %v1561 = vpop.f32.mrb[0].mxu0
        %v1562 = vadd.f32 %v1449, %v1561
        %v1563 = vpop.f32.mrb[0].mxu0
        %v1564 = vadd.f32 %v1451, %v1563
        %v1565 = vpop.f32.mrb[0].mxu0
        %v1566 = vadd.f32 %v1453, %v1565
        %1567 = vmatprep.mubr.bf16.mxu0 %v514
        %1568 = vmatmul.mubr.bf16.gmra.mrb[0].mxu0 %v457
        %v1569 = vpop.f32.mrb[0].mxu0
        %v1570 = vadd.f32 %v1457, %v1569
        %v1571 = vpop.f32.mrb[0].mxu0
        %v1572 = vadd.f32 %v1459, %v1571
        %v1573 = vpop.f32.mrb[0].mxu0
        %v1574 = vadd.f32 %v1461, %v1573
        %v1575 = vpop.f32.mrb[0].mxu0
        %v1576 = vadd.f32 %v1463, %v1575
        %1577 = vmatprep.mubr.bf16.mxu0 %v523
        %1578 = vmatmul.mubr.bf16.gmra.mrb[0].mxu0 %v460
        %v1579 = vpop.f32.mrb[0].mxu0
        %v1580 = vadd.f32 %v1467, %v1579
        %v1581 = vpop.f32.mrb[0].mxu0
        %v1582 = vadd.f32 %v1469, %v1581
        %v1583 = vpop.f32.mrb[0].mxu0
        %v1584 = vadd.f32 %v1471, %v1583
        %v1585 = vpop.f32.mrb[0].mxu0
        %v1586 = vadd.f32 %v1473, %v1585
        %1587 = vmatprep.mubr.bf16.mxu0 %v532
        %1588 = vmatmul.mubr.bf16.gmra.mrb[0].mxu0 %v463
        %v1589 = vpop.f32.mrb[0].mxu0
        %v1590 = vadd.f32 %v1477, %v1589
        %v1591 = vpop.f32.mrb[0].mxu0
        %v1592 = vadd.f32 %v1479, %v1591
        %v1593 = vpop.f32.mrb[0].mxu0
        %v1594 = vadd.f32 %v1481, %v1593
        %v1595 = vpop.f32.mrb[0].mxu0
        %v1596 = vadd.f32 %v1483, %v1595
        %1597 = vmatprep.mubr.bf16.mxu0 %v541
        %1598 = vmatmul.mubr.bf16.gmra.mrb[0].mxu0 %v466
        %v1599 = vpop.f32.mrb[0].mxu0
        %v1600 = vadd.f32 %v1487, %v1599
        %v1601 = vpop.f32.mrb[0].mxu0
        %v1602 = vadd.f32 %v1489, %v1601
        %v1603 = vpop.f32.mrb[0].mxu0
        %v1604 = vadd.f32 %v1491, %v1603
        %v1605 = vpop.f32.mrb[0].mxu0
        %v1606 = vadd.f32 %v1493, %v1605
        %1607 = vmatprep.mubr.bf16.mxu0 %v550
        %1608 = vmatmul.mubr.bf16.gmra.mrb[0].mxu0 %v469
        %v1609 = vpop.f32.mrb[0].mxu0
        %v1610 = vadd.f32 %v1497, %v1609
        %v1611 = vpop.f32.mrb[0].mxu0
        %v1612 = vadd.f32 %v1499, %v1611
        %v1613 = vpop.f32.mrb[0].mxu0
        %v1614 = vadd.f32 %v1501, %v1613
        %v1615 = vpop.f32.mrb[0].mxu0
        %v1616 = vadd.f32 %v1503, %v1615
        %1617 = vdwg.mxu0
        %1618 = vmatprep.subr.bf16.mxu0 %v1249
        %1619 = vmatpush1.bf16.msra.mxu0 %v1248
        %1620 = vmatprep.subr.bf16.mxu0 %v1252
        %1621 = vmatpush1.bf16.msra.mxu0 %v1251
        %1622 = vmatprep.subr.bf16.mxu0 %v1255
        %1623 = vmatpush1.bf16.msra.mxu0 %v1254
        %1624 = vmatprep.subr.bf16.mxu0 %v1258
        %1625 = vmatpush1.bf16.msra.mxu0 %v1257
        %1626 = vmatprep.subr.bf16.mxu0 %v1261
        %1627 = vmatpush1.bf16.msra.mxu0 %v1260
        %1628 = vmatprep.subr.bf16.mxu0 %v1264
        %1629 = vmatpush1.bf16.msra.mxu0 %v1263
        %1630 = vmatprep.subr.bf16.mxu0 %v1267
        %1631 = vmatpush1.bf16.msra.mxu0 %v1266
        %1632 = vmatprep.subr.bf16.mxu0 %v1270
        %1633 = vmatpush1.bf16.msra.mxu0 %v1269
        %1634 = vmatprep.subr.bf16.mxu0 0
        %1635 = vmatpush1.bf16.msra.mxu0 0
        %1636 = vmatprep.subr.bf16.mxu0 0
        %1637 = vmatpush1.bf16.msra.mxu0 0
        %1638 = vmatprep.subr.bf16.mxu0 0
        %1639 = vmatpush1.bf16.msra.mxu0 0
        %1640 = vmatprep.subr.bf16.mxu0 0
        %1641 = vmatpush1.bf16.msra.mxu0 0
        %1642 = vmatprep.subr.bf16.mxu0 0
        %1643 = vmatpush1.bf16.msra.mxu0 0
        %1644 = vmatprep.subr.bf16.mxu0 0
        %1645 = vmatpush1.bf16.msra.mxu0 0
        %1646 = vmatprep.subr.bf16.mxu0 0
        %1647 = vmatpush1.bf16.msra.mxu0 0
        %1648 = vmatprep.subr.bf16.mxu0 0
        %1649 = vmatpush1.bf16.msra.mxu0 0
        %1650 = vmatprep.mubr.bf16.mxu0 0
        %1651 = vmatmul.mubr.bf16.gmra.mrb[0].mxu0 %v562
        %v1652 = vpop.f32.mrb[0].mxu0
        %v1653 = vadd.f32 %v1540, %v1652
        %v1654 = vpop.f32.mrb[0].mxu0
        %v1655 = vadd.f32 %v1542, %v1654
        %v1656 = vpop.f32.mrb[0].mxu0
        %v1657 = vadd.f32 %v1544, %v1656
        %v1658 = vpop.f32.mrb[0].mxu0
        %v1659 = vadd.f32 %v1546, %v1658
        %1660 = vmatprep.mubr.bf16.mxu0 0
        %1661 = vmatmul.mubr.bf16.gmra.mrb[0].mxu0 %v565
        %v1662 = vpop.f32.mrb[0].mxu0
        %v1663 = vadd.f32 %v1550, %v1662
        %v1664 = vpop.f32.mrb[0].mxu0
        %v1665 = vadd.f32 %v1552, %v1664
        %v1666 = vpop.f32.mrb[0].mxu0
        %v1667 = vadd.f32 %v1554, %v1666
        %v1668 = vpop.f32.mrb[0].mxu0
        %v1669 = vadd.f32 %v1556, %v1668
        %1670 = vmatprep.mubr.bf16.mxu0 0
        %1671 = vmatmul.mubr.bf16.gmra.mrb[0].mxu0 %v568
        %v1672 = vpop.f32.mrb[0].mxu0
        %v1673 = vadd.f32 %v1560, %v1672
        %v1674 = vpop.f32.mrb[0].mxu0
        %v1675 = vadd.f32 %v1562, %v1674
        %v1676 = vpop.f32.mrb[0].mxu0
        %v1677 = vadd.f32 %v1564, %v1676
        %v1678 = vpop.f32.mrb[0].mxu0
        %v1679 = vadd.f32 %v1566, %v1678
        %1680 = vmatprep.mubr.bf16.mxu0 0
        %1681 = vmatmul.mubr.bf16.gmra.mrb[0].mxu0 %v571
        %v1682 = vpop.f32.mrb[0].mxu0
        %v1683 = vadd.f32 %v1570, %v1682
        %v1684 = vpop.f32.mrb[0].mxu0
        %v1685 = vadd.f32 %v1572, %v1684
        %v1686 = vpop.f32.mrb[0].mxu0
        %v1687 = vadd.f32 %v1574, %v1686
        %v1688 = vpop.f32.mrb[0].mxu0
        %v1689 = vadd.f32 %v1576, %v1688
        %1690 = vmatprep.mubr.bf16.mxu0 0
        %1691 = vmatmul.mubr.bf16.gmra.mrb[0].mxu0 %v574
        %v1692 = vpop.f32.mrb[0].mxu0
        %v1693 = vadd.f32 %v1580, %v1692
        %v1694 = vpop.f32.mrb[0].mxu0
        %v1695 = vadd.f32 %v1582, %v1694
        %v1696 = vpop.f32.mrb[0].mxu0
        %v1697 = vadd.f32 %v1584, %v1696
        %v1698 = vpop.f32.mrb[0].mxu0
        %v1699 = vadd.f32 %v1586, %v1698
        %1700 = vmatprep.mubr.bf16.mxu0 0
        %1701 = vmatmul.mubr.bf16.gmra.mrb[0].mxu0 %v577
        %v1702 = vpop.f32.mrb[0].mxu0
        %v1703 = vadd.f32 %v1590, %v1702
        %v1704 = vpop.f32.mrb[0].mxu0
        %v1705 = vadd.f32 %v1592, %v1704
        %v1706 = vpop.f32.mrb[0].mxu0
        %v1707 = vadd.f32 %v1594, %v1706
        %v1708 = vpop.f32.mrb[0].mxu0
        %v1709 = vadd.f32 %v1596, %v1708
        %1710 = vmatprep.mubr.bf16.mxu0 0
        %1711 = vmatmul.mubr.bf16.gmra.mrb[0].mxu0 %v580
        %v1712 = vpop.f32.mrb[0].mxu0
        %v1713 = vadd.f32 %v1600, %v1712
        %v1714 = vpop.f32.mrb[0].mxu0
        %v1715 = vadd.f32 %v1602, %v1714
        %v1716 = vpop.f32.mrb[0].mxu0
        %v1717 = vadd.f32 %v1604, %v1716
        %v1718 = vpop.f32.mrb[0].mxu0
        %v1719 = vadd.f32 %v1606, %v1718
        %1720 = vmatprep.mubr.bf16.mxu0 0
        %1721 = vmatmul.mubr.bf16.gmra.mrb[0].mxu0 %v583
        %v1722 = vpop.f32.mrb[0].mxu0
        %v1723 = vadd.f32 %v1610, %v1722
        %v1724 = vpop.f32.mrb[0].mxu0
        %v1725 = vadd.f32 %v1612, %v1724
        %v1726 = vpop.f32.mrb[0].mxu0
        %v1727 = vadd.f32 %v1614, %v1726
        %v1728 = vpop.f32.mrb[0].mxu0
        %v1729 = vadd.f32 %v1616, %v1728
        %1730 = vdwg.mxu0
        %1731 = vmatprep.subr.bf16.mxu0 0
        %1732 = vmatpush1.bf16.msra.mxu0 %v1154
        %1733 = vmatprep.subr.bf16.mxu0 0
        %1734 = vmatpush1.bf16.msra.mxu0 %v1157
        %1735 = vmatprep.subr.bf16.mxu0 0
        %1736 = vmatpush1.bf16.msra.mxu0 %v1160
        %1737 = vmatprep.subr.bf16.mxu0 0
        %1738 = vmatpush1.bf16.msra.mxu0 %v1163
        %1739 = vmatprep.subr.bf16.mxu0 0
        %1740 = vmatpush1.bf16.msra.mxu0 %v1166
        %1741 = vmatprep.subr.bf16.mxu0 0
        %1742 = vmatpush1.bf16.msra.mxu0 %v1169
        %1743 = vmatprep.subr.bf16.mxu0 0
        %1744 = vmatpush1.bf16.msra.mxu0 %v1172
        %1745 = vmatprep.subr.bf16.mxu0 0
        %1746 = vmatpush1.bf16.msra.mxu0 %v1175
        %1747 = vmatprep.subr.bf16.mxu0 0
        %1748 = vmatpush1.bf16.msra.mxu0 %v1178
        %1749 = vmatprep.subr.bf16.mxu0 0
        %1750 = vmatpush1.bf16.msra.mxu0 %v1181
        %1751 = vmatprep.subr.bf16.mxu0 0
        %1752 = vmatpush1.bf16.msra.mxu0 %v1184
        %1753 = vmatprep.subr.bf16.mxu0 0
        %1754 = vmatpush1.bf16.msra.mxu0 %v1187
        %1755 = vmatprep.subr.bf16.mxu0 0
        %1756 = vmatpush1.bf16.msra.mxu0 %v1190
        %1757 = vmatprep.subr.bf16.mxu0 0
        %1758 = vmatpush1.bf16.msra.mxu0 %v1193
        %1759 = vmatprep.subr.bf16.mxu0 0
        %1760 = vmatpush1.bf16.msra.mxu0 %v1196
        %1761 = vmatprep.subr.bf16.mxu0 0
        %1762 = vmatpush1.bf16.msra.mxu0 %v1199
        %1763 = vmatprep.mubr.bf16.mxu0 %v352
        %1764 = vmatmul.mubr.bf16.gmra.mrb[0].mxu0 %v300
        %v1765 = vpop.f32.mrb[0].mxu0
        %v1766 = vadd.f32 0.0, %v1765
        %v1767 = vpop.f32.mrb[0].mxu0
        %v1768 = vpop.f32.mrb[0].mxu0
        %v1769 = vadd.f32 0.0, %v1768
        %v1770 = vpop.f32.mrb[0].mxu0
        %1771 = vmatprep.mubr.bf16.mxu0 %v364
        %1772 = vmatmul.mubr.bf16.gmra.mrb[0].mxu0 %v301
        %v1773 = vpop.f32.mrb[0].mxu0
        %v1774 = vadd.f32 0.0, %v1773
        %v1775 = vpop.f32.mrb[0].mxu0
        %v1776 = vpop.f32.mrb[0].mxu0
        %v1777 = vadd.f32 0.0, %v1776
        %v1778 = vpop.f32.mrb[0].mxu0
        %1779 = vmatprep.mubr.bf16.mxu0 %v376
        %1780 = vmatmul.mubr.bf16.gmra.mrb[0].mxu0 %v302
        %v1781 = vpop.f32.mrb[0].mxu0
        %v1782 = vadd.f32 0.0, %v1781
        %v1783 = vpop.f32.mrb[0].mxu0
        %v1784 = vpop.f32.mrb[0].mxu0
        %v1785 = vadd.f32 0.0, %v1784
        %v1786 = vpop.f32.mrb[0].mxu0
        %1787 = vmatprep.mubr.bf16.mxu0 %v388
        %1788 = vmatmul.mubr.bf16.gmra.mrb[0].mxu0 %v303
        %v1789 = vpop.f32.mrb[0].mxu0
        %v1790 = vadd.f32 0.0, %v1789
        %v1791 = vpop.f32.mrb[0].mxu0
        %v1792 = vpop.f32.mrb[0].mxu0
        %v1793 = vadd.f32 0.0, %v1792
        %v1794 = vpop.f32.mrb[0].mxu0
        %1795 = vmatprep.mubr.bf16.mxu0 %v400
        %1796 = vmatmul.mubr.bf16.gmra.mrb[0].mxu0 %v304
        %v1797 = vpop.f32.mrb[0].mxu0
        %v1798 = vadd.f32 0.0, %v1797
        %v1799 = vpop.f32.mrb[0].mxu0
        %v1800 = vpop.f32.mrb[0].mxu0
        %v1801 = vadd.f32 0.0, %v1800
        %v1802 = vpop.f32.mrb[0].mxu0
        %1803 = vmatprep.mubr.bf16.mxu0 %v412
        %1804 = vmatmul.mubr.bf16.gmra.mrb[0].mxu0 %v305
        %v1805 = vpop.f32.mrb[0].mxu0
        %v1806 = vadd.f32 0.0, %v1805
        %v1807 = vpop.f32.mrb[0].mxu0
        %v1808 = vpop.f32.mrb[0].mxu0
        %v1809 = vadd.f32 0.0, %v1808
        %v1810 = vpop.f32.mrb[0].mxu0
        %1811 = vmatprep.mubr.bf16.mxu0 %v424
        %1812 = vmatmul.mubr.bf16.gmra.mrb[0].mxu0 %v306
        %v1813 = vpop.f32.mrb[0].mxu0
        %v1814 = vadd.f32 0.0, %v1813
        %v1815 = vpop.f32.mrb[0].mxu0
        %v1816 = vpop.f32.mrb[0].mxu0
        %v1817 = vadd.f32 0.0, %v1816
        %v1818 = vpop.f32.mrb[0].mxu0
        %1819 = vmatprep.mubr.bf16.mxu0 %v436
        %1820 = vmatmul.mubr.bf16.gmra.mrb[0].mxu0 %v307
        %v1821 = vpop.f32.mrb[0].mxu0
        %v1822 = vadd.f32 0.0, %v1821
        %v1823 = vpop.f32.mrb[0].mxu0
        %v1824 = vpop.f32.mrb[0].mxu0
        %v1825 = vadd.f32 0.0, %v1824
        %v1826 = vpop.f32.mrb[0].mxu0
        %1827 = vdwg.mxu0
        %1828 = vmatprep.subr.bf16.mxu0 0
        %1829 = vmatpush1.bf16.msra.mxu0 %v1202
        %1830 = vmatprep.subr.bf16.mxu0 0
        %1831 = vmatpush1.bf16.msra.mxu0 %v1205
        %1832 = vmatprep.subr.bf16.mxu0 0
        %1833 = vmatpush1.bf16.msra.mxu0 %v1208
        %1834 = vmatprep.subr.bf16.mxu0 0
        %1835 = vmatpush1.bf16.msra.mxu0 %v1211
        %1836 = vmatprep.subr.bf16.mxu0 0
        %1837 = vmatpush1.bf16.msra.mxu0 %v1214
        %1838 = vmatprep.subr.bf16.mxu0 0
        %1839 = vmatpush1.bf16.msra.mxu0 %v1217
        %1840 = vmatprep.subr.bf16.mxu0 0
        %1841 = vmatpush1.bf16.msra.mxu0 %v1220
        %1842 = vmatprep.subr.bf16.mxu0 0
        %1843 = vmatpush1.bf16.msra.mxu0 %v1223
        %1844 = vmatprep.subr.bf16.mxu0 0
        %1845 = vmatpush1.bf16.msra.mxu0 %v1226
        %1846 = vmatprep.subr.bf16.mxu0 0
        %1847 = vmatpush1.bf16.msra.mxu0 %v1229
        %1848 = vmatprep.subr.bf16.mxu0 0
        %1849 = vmatpush1.bf16.msra.mxu0 %v1232
        %1850 = vmatprep.subr.bf16.mxu0 0
        %1851 = vmatpush1.bf16.msra.mxu0 %v1235
        %1852 = vmatprep.subr.bf16.mxu0 0
        %1853 = vmatpush1.bf16.msra.mxu0 %v1238
        %1854 = vmatprep.subr.bf16.mxu0 0
        %1855 = vmatpush1.bf16.msra.mxu0 %v1241
        %1856 = vmatprep.subr.bf16.mxu0 0
        %1857 = vmatpush1.bf16.msra.mxu0 %v1244
        %1858 = vmatprep.subr.bf16.mxu0 0
        %1859 = vmatpush1.bf16.msra.mxu0 %v1247
        %1860 = vmatprep.mubr.bf16.mxu0 %v487
        %1861 = vmatmul.mubr.bf16.gmra.mrb[0].mxu0 %v448
        %v1862 = vpop.f32.mrb[0].mxu0
        %v1863 = vadd.f32 %v1766, %v1862
        %v1864 = vpop.f32.mrb[0].mxu0
        %v1865 = vpop.f32.mrb[0].mxu0
        %v1866 = vadd.f32 %v1769, %v1865
        %v1867 = vpop.f32.mrb[0].mxu0
        %1868 = vmatprep.mubr.bf16.mxu0 %v496
        %1869 = vmatmul.mubr.bf16.gmra.mrb[0].mxu0 %v451
        %v1870 = vpop.f32.mrb[0].mxu0
        %v1871 = vadd.f32 %v1774, %v1870
        %v1872 = vpop.f32.mrb[0].mxu0
        %v1873 = vpop.f32.mrb[0].mxu0
        %v1874 = vadd.f32 %v1777, %v1873
        %v1875 = vpop.f32.mrb[0].mxu0
        %1876 = vmatprep.mubr.bf16.mxu0 %v505
        %1877 = vmatmul.mubr.bf16.gmra.mrb[0].mxu0 %v454
        %v1878 = vpop.f32.mrb[0].mxu0
        %v1879 = vadd.f32 %v1782, %v1878
        %v1880 = vpop.f32.mrb[0].mxu0
        %v1881 = vpop.f32.mrb[0].mxu0
        %v1882 = vadd.f32 %v1785, %v1881
        %v1883 = vpop.f32.mrb[0].mxu0
        %1884 = vmatprep.mubr.bf16.mxu0 %v514
        %1885 = vmatmul.mubr.bf16.gmra.mrb[0].mxu0 %v457
        %v1886 = vpop.f32.mrb[0].mxu0
        %v1887 = vadd.f32 %v1790, %v1886
        %v1888 = vpop.f32.mrb[0].mxu0
        %v1889 = vpop.f32.mrb[0].mxu0
        %v1890 = vadd.f32 %v1793, %v1889
        %v1891 = vpop.f32.mrb[0].mxu0
        %1892 = vmatprep.mubr.bf16.mxu0 %v523
        %1893 = vmatmul.mubr.bf16.gmra.mrb[0].mxu0 %v460
        %v1894 = vpop.f32.mrb[0].mxu0
        %v1895 = vadd.f32 %v1798, %v1894
        %v1896 = vpop.f32.mrb[0].mxu0
        %v1897 = vpop.f32.mrb[0].mxu0
        %v1898 = vadd.f32 %v1801, %v1897
        %v1899 = vpop.f32.mrb[0].mxu0
        %1900 = vmatprep.mubr.bf16.mxu0 %v532
        %1901 = vmatmul.mubr.bf16.gmra.mrb[0].mxu0 %v463
        %v1902 = vpop.f32.mrb[0].mxu0
        %v1903 = vadd.f32 %v1806, %v1902
        %v1904 = vpop.f32.mrb[0].mxu0
        %v1905 = vpop.f32.mrb[0].mxu0
        %v1906 = vadd.f32 %v1809, %v1905
        %v1907 = vpop.f32.mrb[0].mxu0
        %1908 = vmatprep.mubr.bf16.mxu0 %v541
        %1909 = vmatmul.mubr.bf16.gmra.mrb[0].mxu0 %v466
        %v1910 = vpop.f32.mrb[0].mxu0
        %v1911 = vadd.f32 %v1814, %v1910
        %v1912 = vpop.f32.mrb[0].mxu0
        %v1913 = vpop.f32.mrb[0].mxu0
        %v1914 = vadd.f32 %v1817, %v1913
        %v1915 = vpop.f32.mrb[0].mxu0
        %1916 = vmatprep.mubr.bf16.mxu0 %v550
        %1917 = vmatmul.mubr.bf16.gmra.mrb[0].mxu0 %v469
        %v1918 = vpop.f32.mrb[0].mxu0
        %v1919 = vadd.f32 %v1822, %v1918
        %v1920 = vpop.f32.mrb[0].mxu0
        %v1921 = vpop.f32.mrb[0].mxu0
        %v1922 = vadd.f32 %v1825, %v1921
        %v1923 = vpop.f32.mrb[0].mxu0
        %1924 = vdwg.mxu0
        %1925 = vmatprep.subr.bf16.mxu0 0
        %1926 = vmatpush1.bf16.msra.mxu0 %v1250
        %1927 = vmatprep.subr.bf16.mxu0 0
        %1928 = vmatpush1.bf16.msra.mxu0 %v1253
        %1929 = vmatprep.subr.bf16.mxu0 0
        %1930 = vmatpush1.bf16.msra.mxu0 %v1256
        %1931 = vmatprep.subr.bf16.mxu0 0
        %1932 = vmatpush1.bf16.msra.mxu0 %v1259
        %1933 = vmatprep.subr.bf16.mxu0 0
        %1934 = vmatpush1.bf16.msra.mxu0 %v1262
        %1935 = vmatprep.subr.bf16.mxu0 0
        %1936 = vmatpush1.bf16.msra.mxu0 %v1265
        %1937 = vmatprep.subr.bf16.mxu0 0
        %1938 = vmatpush1.bf16.msra.mxu0 %v1268
        %1939 = vmatprep.subr.bf16.mxu0 0
        %1940 = vmatpush1.bf16.msra.mxu0 %v1271
        %1941 = vmatprep.subr.bf16.mxu0 0
        %1942 = vmatpush1.bf16.msra.mxu0 0
        %1943 = vmatprep.subr.bf16.mxu0 0
        %1944 = vmatpush1.bf16.msra.mxu0 0
        %1945 = vmatprep.subr.bf16.mxu0 0
        %1946 = vmatpush1.bf16.msra.mxu0 0
        %1947 = vmatprep.subr.bf16.mxu0 0
        %1948 = vmatpush1.bf16.msra.mxu0 0
        %1949 = vmatprep.subr.bf16.mxu0 0
        %1950 = vmatpush1.bf16.msra.mxu0 0
        %1951 = vmatprep.subr.bf16.mxu0 0
        %1952 = vmatpush1.bf16.msra.mxu0 0
        %1953 = vmatprep.subr.bf16.mxu0 0
        %1954 = vmatpush1.bf16.msra.mxu0 0
        %1955 = vmatprep.subr.bf16.mxu0 0
        %1956 = vmatpush1.bf16.msra.mxu0 0
        %1957 = vmatprep.mubr.bf16.mxu0 0
        %1958 = vmatmul.mubr.bf16.gmra.mrb[0].mxu0 %v562
        %v1959 = vpop.f32.mrb[0].mxu0
        %v1960 = vadd.f32 %v1863, %v1959
        %v1961 = vpop.f32.mrb[0].mxu0
        %v1962 = vpop.f32.mrb[0].mxu0
        %v1963 = vadd.f32 %v1866, %v1962
        %v1964 = vpop.f32.mrb[0].mxu0
        %1965 = vmatprep.mubr.bf16.mxu0 0
        %1966 = vmatmul.mubr.bf16.gmra.mrb[0].mxu0 %v565
        %v1967 = vpop.f32.mrb[0].mxu0
        %v1968 = vadd.f32 %v1871, %v1967
        %v1969 = vpop.f32.mrb[0].mxu0
        %v1970 = vpop.f32.mrb[0].mxu0
        %v1971 = vadd.f32 %v1874, %v1970
        %v1972 = vpop.f32.mrb[0].mxu0
        %1973 = vmatprep.mubr.bf16.mxu0 0
        %1974 = vmatmul.mubr.bf16.gmra.mrb[0].mxu0 %v568
        %v1975 = vpop.f32.mrb[0].mxu0
        %v1976 = vadd.f32 %v1879, %v1975
        %v1977 = vpop.f32.mrb[0].mxu0
        %v1978 = vpop.f32.mrb[0].mxu0
        %v1979 = vadd.f32 %v1882, %v1978
        %v1980 = vpop.f32.mrb[0].mxu0
        %1981 = vmatprep.mubr.bf16.mxu0 0
        %1982 = vmatmul.mubr.bf16.gmra.mrb[0].mxu0 %v571
        %v1983 = vpop.f32.mrb[0].mxu0
        %v1984 = vadd.f32 %v1887, %v1983
        %v1985 = vpop.f32.mrb[0].mxu0
        %v1986 = vpop.f32.mrb[0].mxu0
        %v1987 = vadd.f32 %v1890, %v1986
        %v1988 = vpop.f32.mrb[0].mxu0
        %1989 = vmatprep.mubr.bf16.mxu0 0
        %1990 = vmatmul.mubr.bf16.gmra.mrb[0].mxu0 %v574
        %v1991 = vpop.f32.mrb[0].mxu0
        %v1992 = vadd.f32 %v1895, %v1991
        %v1993 = vpop.f32.mrb[0].mxu0
        %v1994 = vpop.f32.mrb[0].mxu0
        %v1995 = vadd.f32 %v1898, %v1994
        %v1996 = vpop.f32.mrb[0].mxu0
        %1997 = vmatprep.mubr.bf16.mxu0 0
        %1998 = vmatmul.mubr.bf16.gmra.mrb[0].mxu0 %v577
        %v1999 = vpop.f32.mrb[0].mxu0
        %v2000 = vadd.f32 %v1903, %v1999
        %v2001 = vpop.f32.mrb[0].mxu0
        %v2002 = vpop.f32.mrb[0].mxu0
        %v2003 = vadd.f32 %v1906, %v2002
        %v2004 = vpop.f32.mrb[0].mxu0
        %2005 = vmatprep.mubr.bf16.mxu0 0
        %2006 = vmatmul.mubr.bf16.gmra.mrb[0].mxu0 %v580
        %v2007 = vpop.f32.mrb[0].mxu0
        %v2008 = vadd.f32 %v1911, %v2007
        %v2009 = vpop.f32.mrb[0].mxu0
        %v2010 = vpop.f32.mrb[0].mxu0
        %v2011 = vadd.f32 %v1914, %v2010
        %v2012 = vpop.f32.mrb[0].mxu0
        %2013 = vmatprep.mubr.bf16.mxu0 0
        %2014 = vmatmul.mubr.bf16.gmra.mrb[0].mxu0 %v583
        %v2015 = vpop.f32.mrb[0].mxu0
        %v2016 = vadd.f32 %v1919, %v2015
        %v2017 = vpop.f32.mrb[0].mxu0
        %v2018 = vpop.f32.mrb[0].mxu0
        %v2019 = vadd.f32 %v1922, %v2018
        %v2020 = vpop.f32.mrb[0].mxu0
        %2021 = vdwg.mxu0
        %v2022 = vld [vmem:[%s2] sm:$0xff]
        %v2023 = vld [vmem:[%s2 + $0x8] sm:$0xff]
        %v2024 = vld [vmem:[%s2 + $0x10] sm:$0xff]
        %v2025 = vld [vmem:[%s2 + $0x18] sm:$0xff]
        %v2026 = vld [vmem:[%s2 + $0x20] sm:$0xff]
        %v2027 = vld [vmem:[%s2 + $0x28] sm:$0xff]
        %v2028 = vadd.f32 %v1653, %v2022
        %v2029 = vadd.f32 %v1655, %v2023
        %v2030 = vadd.f32 %v1960, %v2024
        %v2031 = vadd.f32 %v1657, %v2025
        %v2032 = vadd.f32 %v1659, %v2026
        %v2033 = vadd.f32 %v1963, %v2027
        %v2034 = vadd.f32 %v1663, %v2022
        %v2035 = vadd.f32 %v1665, %v2023
        %v2036 = vadd.f32 %v1968, %v2024
        %v2037 = vadd.f32 %v1667, %v2025
        %v2038 = vadd.f32 %v1669, %v2026
        %v2039 = vadd.f32 %v1971, %v2027
        %v2040 = vadd.f32 %v1673, %v2022
        %v2041 = vadd.f32 %v1675, %v2023
        %v2042 = vadd.f32 %v1976, %v2024
        %v2043 = vadd.f32 %v1677, %v2025
        %v2044 = vadd.f32 %v1679, %v2026
        %v2045 = vadd.f32 %v1979, %v2027
        %v2046 = vadd.f32 %v1683, %v2022
        %v2047 = vadd.f32 %v1685, %v2023
        %v2048 = vadd.f32 %v1984, %v2024
        %v2049 = vadd.f32 %v1687, %v2025
        %v2050 = vadd.f32 %v1689, %v2026
        %v2051 = vadd.f32 %v1987, %v2027
        %v2052 = vadd.f32 %v1693, %v2022
        %v2053 = vadd.f32 %v1695, %v2023
        %v2054 = vadd.f32 %v1992, %v2024
        %v2055 = vadd.f32 %v1697, %v2025
        %v2056 = vadd.f32 %v1699, %v2026
        %v2057 = vadd.f32 %v1995, %v2027
        %v2058 = vadd.f32 %v1703, %v2022
        %v2059 = vadd.f32 %v1705, %v2023
        %v2060 = vadd.f32 %v2000, %v2024
        %v2061 = vadd.f32 %v1707, %v2025
        %v2062 = vadd.f32 %v1709, %v2026
        %v2063 = vadd.f32 %v2003, %v2027
        %v2064 = vadd.f32 %v1713, %v2022
        %v2065 = vadd.f32 %v1715, %v2023
        %v2066 = vadd.f32 %v2008, %v2024
        %v2067 = vadd.f32 %v1717, %v2025
        %v2068 = vadd.f32 %v1719, %v2026
        %v2069 = vadd.f32 %v2011, %v2027
        %v2070 = vadd.f32 %v1723, %v2022
        %v2071 = vadd.f32 %v1725, %v2023
        %v2072 = vadd.f32 %v2016, %v2024
        %v2073 = vadd.f32 %v1727, %v2025
        %v2074 = vadd.f32 %v1729, %v2026
        %v2075 = vadd.f32 %v2019, %v2027
        %v2076 = vmax.f32 %v2028, 0.0
        %v2077 = vmax.f32 %v2029, 0.0
        %v2078 = vmax.f32 %v2030, 0.0
        %v2079 = vmax.f32 %v2031, 0.0
        %v2080 = vmax.f32 %v2032, 0.0
        %v2081 = vmax.f32 %v2033, 0.0
        %v2082 = vmax.f32 %v2034, 0.0
        %v2083 = vmax.f32 %v2035, 0.0
        %v2084 = vmax.f32 %v2036, 0.0
        %v2085 = vmax.f32 %v2037, 0.0
        %v2086 = vmax.f32 %v2038, 0.0
        %v2087 = vmax.f32 %v2039, 0.0
        %v2088 = vmax.f32 %v2040, 0.0
        %v2089 = vmax.f32 %v2041, 0.0
        %v2090 = vmax.f32 %v2042, 0.0
        %v2091 = vmax.f32 %v2043, 0.0
        %v2092 = vmax.f32 %v2044, 0.0
        %v2093 = vmax.f32 %v2045, 0.0
        %v2094 = vmax.f32 %v2046, 0.0
        %v2095 = vmax.f32 %v2047, 0.0
        %v2096 = vmax.f32 %v2048, 0.0
        %v2097 = vmax.f32 %v2049, 0.0
        %v2098 = vmax.f32 %v2050, 0.0
        %v2099 = vmax.f32 %v2051, 0.0
        %v2100 = vmax.f32 %v2052, 0.0
        %v2101 = vmax.f32 %v2053, 0.0
        %v2102 = vmax.f32 %v2054, 0.0
        %v2103 = vmax.f32 %v2055, 0.0
        %v2104 = vmax.f32 %v2056, 0.0
        %v2105 = vmax.f32 %v2057, 0.0
        %v2106 = vmax.f32 %v2058, 0.0
        %v2107 = vmax.f32 %v2059, 0.0
        %v2108 = vmax.f32 %v2060, 0.0
        %v2109 = vmax.f32 %v2061, 0.0
        %v2110 = vmax.f32 %v2062, 0.0
        %v2111 = vmax.f32 %v2063, 0.0
        %v2112 = vmax.f32 %v2064, 0.0
        %v2113 = vmax.f32 %v2065, 0.0
        %v2114 = vmax.f32 %v2066, 0.0
        %v2115 = vmax.f32 %v2067, 0.0
        %v2116 = vmax.f32 %v2068, 0.0
        %v2117 = vmax.f32 %v2069, 0.0
        %v2118 = vmax.f32 %v2070, 0.0
        %v2119 = vmax.f32 %v2071, 0.0
        %v2120 = vmax.f32 %v2072, 0.0
        %v2121 = vmax.f32 %v2073, 0.0
        %v2122 = vmax.f32 %v2074, 0.0
        %v2123 = vmax.f32 %v2075, 0.0
        %v2124 = vmax.f32 %v2076, %v2079
        %v2125 = vrot.slane %v2124, 4
        %v2126 = vmax.f32 %v2124, %v2125
        %v2127 = vrot.slane %v2126, 2
        %v2128 = vmax.f32 %v2126, %v2127
        %v2129 = vrot.slane %v2128, 1
        %v2130 = vmax.f32 %v2128, %v2129
        %v2131 = vmax.f32 %v2077, %v2080
        %v2132 = vrot.slane %v2131, 4
        %v2133 = vmax.f32 %v2131, %v2132
        %v2134 = vrot.slane %v2133, 2
        %v2135 = vmax.f32 %v2133, %v2134
        %v2136 = vrot.slane %v2135, 1
        %v2137 = vmax.f32 %v2135, %v2136
        %v2138 = vmax.f32 %v2078, %v2081
        %v2139 = vrot.slane %v2138, 4
        %v2140 = vmax.f32 %v2138, %v2139
        %v2141 = vrot.slane %v2140, 2
        %v2142 = vmax.f32 %v2140, %v2141
        %v2143 = vrot.slane %v2142, 1
        %v2144 = vmax.f32 %v2142, %v2143
        %v2145 = vmax.f32 %v2082, %v2085
        %v2146 = vrot.slane %v2145, 4
        %v2147 = vmax.f32 %v2145, %v2146
        %v2148 = vrot.slane %v2147, 2
        %v2149 = vmax.f32 %v2147, %v2148
        %v2150 = vrot.slane %v2149, 1
        %v2151 = vmax.f32 %v2149, %v2150
        %v2152 = vmax.f32 %v2083, %v2086
        %v2153 = vrot.slane %v2152, 4
        %v2154 = vmax.f32 %v2152, %v2153
        %v2155 = vrot.slane %v2154, 2
        %v2156 = vmax.f32 %v2154, %v2155
        %v2157 = vrot.slane %v2156, 1
        %v2158 = vmax.f32 %v2156, %v2157
        %v2159 = vmax.f32 %v2084, %v2087
        %v2160 = vrot.slane %v2159, 4
        %v2161 = vmax.f32 %v2159, %v2160
        %v2162 = vrot.slane %v2161, 2
        %v2163 = vmax.f32 %v2161, %v2162
        %v2164 = vrot.slane %v2163, 1
        %v2165 = vmax.f32 %v2163, %v2164
        %v2166 = vmax.f32 %v2088, %v2091
        %v2167 = vrot.slane %v2166, 4
        %v2168 = vmax.f32 %v2166, %v2167
        %v2169 = vrot.slane %v2168, 2
        %v2170 = vmax.f32 %v2168, %v2169
        %v2171 = vrot.slane %v2170, 1
        %v2172 = vmax.f32 %v2170, %v2171
        %v2173 = vmax.f32 %v2089, %v2092
        %v2174 = vrot.slane %v2173, 4
        %v2175 = vmax.f32 %v2173, %v2174
        %v2176 = vrot.slane %v2175, 2
        %v2177 = vmax.f32 %v2175, %v2176
        %v2178 = vrot.slane %v2177, 1
        %v2179 = vmax.f32 %v2177, %v2178
        %v2180 = vmax.f32 %v2090, %v2093
        %v2181 = vrot.slane %v2180, 4
        %v2182 = vmax.f32 %v2180, %v2181
        %v2183 = vrot.slane %v2182, 2
        %v2184 = vmax.f32 %v2182, %v2183
        %v2185 = vrot.slane %v2184, 1
        %v2186 = vmax.f32 %v2184, %v2185
        %v2187 = vmax.f32 %v2094, %v2097
        %v2188 = vrot.slane %v2187, 4
        %v2189 = vmax.f32 %v2187, %v2188
        %v2190 = vrot.slane %v2189, 2
        %v2191 = vmax.f32 %v2189, %v2190
        %v2192 = vrot.slane %v2191, 1
        %v2193 = vmax.f32 %v2191, %v2192
        %v2194 = vmax.f32 %v2095, %v2098
        %v2195 = vrot.slane %v2194, 4
        %v2196 = vmax.f32 %v2194, %v2195
        %v2197 = vrot.slane %v2196, 2
        %v2198 = vmax.f32 %v2196, %v2197
        %v2199 = vrot.slane %v2198, 1
        %v2200 = vmax.f32 %v2198, %v2199
        %v2201 = vmax.f32 %v2096, %v2099
        %v2202 = vrot.slane %v2201, 4
        %v2203 = vmax.f32 %v2201, %v2202
        %v2204 = vrot.slane %v2203, 2
        %v2205 = vmax.f32 %v2203, %v2204
        %v2206 = vrot.slane %v2205, 1
        %v2207 = vmax.f32 %v2205, %v2206
        %v2208 = vmax.f32 %v2100, %v2103
        %v2209 = vrot.slane %v2208, 4
        %v2210 = vmax.f32 %v2208, %v2209
        %v2211 = vrot.slane %v2210, 2
        %v2212 = vmax.f32 %v2210, %v2211
        %v2213 = vrot.slane %v2212, 1
        %v2214 = vmax.f32 %v2212, %v2213
        %v2215 = vmax.f32 %v2101, %v2104
        %v2216 = vrot.slane %v2215, 4
        %v2217 = vmax.f32 %v2215, %v2216
        %v2218 = vrot.slane %v2217, 2
        %v2219 = vmax.f32 %v2217, %v2218
        %v2220 = vrot.slane %v2219, 1
        %v2221 = vmax.f32 %v2219, %v2220
        %v2222 = vmax.f32 %v2102, %v2105
        %v2223 = vrot.slane %v2222, 4
        %v2224 = vmax.f32 %v2222, %v2223
        %v2225 = vrot.slane %v2224, 2
        %v2226 = vmax.f32 %v2224, %v2225
        %v2227 = vrot.slane %v2226, 1
        %v2228 = vmax.f32 %v2226, %v2227
        %v2229 = vmax.f32 %v2106, %v2109
        %v2230 = vrot.slane %v2229, 4
        %v2231 = vmax.f32 %v2229, %v2230
        %v2232 = vrot.slane %v2231, 2
        %v2233 = vmax.f32 %v2231, %v2232
        %v2234 = vrot.slane %v2233, 1
        %v2235 = vmax.f32 %v2233, %v2234
        %v2236 = vmax.f32 %v2107, %v2110
        %v2237 = vrot.slane %v2236, 4
        %v2238 = vmax.f32 %v2236, %v2237
        %v2239 = vrot.slane %v2238, 2
        %v2240 = vmax.f32 %v2238, %v2239
        %v2241 = vrot.slane %v2240, 1
        %v2242 = vmax.f32 %v2240, %v2241
        %v2243 = vmax.f32 %v2108, %v2111
        %v2244 = vrot.slane %v2243, 4
        %v2245 = vmax.f32 %v2243, %v2244
        %v2246 = vrot.slane %v2245, 2
        %v2247 = vmax.f32 %v2245, %v2246
        %v2248 = vrot.slane %v2247, 1
        %v2249 = vmax.f32 %v2247, %v2248
        %v2250 = vmax.f32 %v2112, %v2115
        %v2251 = vrot.slane %v2250, 4
        %v2252 = vmax.f32 %v2250, %v2251
        %v2253 = vrot.slane %v2252, 2
        %v2254 = vmax.f32 %v2252, %v2253
        %v2255 = vrot.slane %v2254, 1
        %v2256 = vmax.f32 %v2254, %v2255
        %v2257 = vmax.f32 %v2113, %v2116
        %v2258 = vrot.slane %v2257, 4
        %v2259 = vmax.f32 %v2257, %v2258
        %v2260 = vrot.slane %v2259, 2
        %v2261 = vmax.f32 %v2259, %v2260
        %v2262 = vrot.slane %v2261, 1
        %v2263 = vmax.f32 %v2261, %v2262
        %v2264 = vmax.f32 %v2114, %v2117
        %v2265 = vrot.slane %v2264, 4
        %v2266 = vmax.f32 %v2264, %v2265
        %v2267 = vrot.slane %v2266, 2
        %v2268 = vmax.f32 %v2266, %v2267
        %v2269 = vrot.slane %v2268, 1
        %v2270 = vmax.f32 %v2268, %v2269
        %v2271 = vmax.f32 %v2118, %v2121
        %v2272 = vrot.slane %v2271, 4
        %v2273 = vmax.f32 %v2271, %v2272
        %v2274 = vrot.slane %v2273, 2
        %v2275 = vmax.f32 %v2273, %v2274
        %v2276 = vrot.slane %v2275, 1
        %v2277 = vmax.f32 %v2275, %v2276
        %v2278 = vmax.f32 %v2119, %v2122
        %v2279 = vrot.slane %v2278, 4
        %v2280 = vmax.f32 %v2278, %v2279
        %v2281 = vrot.slane %v2280, 2
        %v2282 = vmax.f32 %v2280, %v2281
        %v2283 = vrot.slane %v2282, 1
        %v2284 = vmax.f32 %v2282, %v2283
        %v2285 = vmax.f32 %v2120, %v2123
        %v2286 = vrot.slane %v2285, 4
        %v2287 = vmax.f32 %v2285, %v2286
        %v2288 = vrot.slane %v2287, 2
        %v2289 = vmax.f32 %v2287, %v2288
        %v2290 = vrot.slane %v2289, 1
        %v2291 = vmax.f32 %v2289, %v2290
        %v2292 = vld [vmem:[%s3] sm:$0xff]
        %v2293 = vld [vmem:[%s3 + $0x8] sm:$0xff]
        %v2294 = vld [vmem:[%s3 + $0x10] sm:$0xff]
        %v2295 = vld [vmem:[%s3 + $0x18] sm:$0xff]
        %v2296 = vld [vmem:[%s3 + $0x20] sm:$0xff]
        %v2297 = vld [vmem:[%s3 + $0x28] sm:$0xff]
        %v2298 = vld [vmem:[%s3 + $0x30] sm:$0xff]
        %v2299 = vld [vmem:[%s3 + $0x38] sm:$0xff]
        %v2300 = vld [vmem:[%s3 + $0x40] sm:$0xff]
        %v2301 = vld [vmem:[%s3 + $0x48] sm:$0xff]
        %v2302 = vld [vmem:[%s3 + $0x50] sm:$0xff]
        %v2303 = vld [vmem:[%s3 + $0x58] sm:$0xff]
        %v2304 = vld [vmem:[%s3 + $0x60] sm:$0xff]
        %v2305 = vld [vmem:[%s3 + $0x68] sm:$0xff]
        %v2306 = vld [vmem:[%s3 + $0x70] sm:$0xff]
        %v2307 = vld [vmem:[%s3 + $0x78] sm:$0xff]
        %v2308 = vld [vmem:[%s3 + $0x80] sm:$0xff]
        %v2309 = vld [vmem:[%s3 + $0x88] sm:$0xff]
        %v2310 = vld [vmem:[%s3 + $0x90] sm:$0xff]
        %v2311 = vld [vmem:[%s3 + $0x98] sm:$0xff]
        %v2312 = vld [vmem:[%s3 + $0xa0] sm:$0xff]
        %v2313 = vld [vmem:[%s3 + $0xa8] sm:$0xff]
        %v2314 = vld [vmem:[%s3 + $0xb0] sm:$0xff]
        %v2315 = vld [vmem:[%s3 + $0xb8] sm:$0xff]
        %v2316 = vld [vmem:[%s3 + $0xc0] sm:$0xff]
        %v2317 = vld [vmem:[%s3 + $0xc8] sm:$0xff]
        %v2318 = vld [vmem:[%s3 + $0xd0] sm:$0xff]
        %v2319 = vld [vmem:[%s3 + $0xd8] sm:$0xff]
        %v2320 = vld [vmem:[%s3 + $0xe0] sm:$0xff]
        %v2321 = vld [vmem:[%s3 + $0xe8] sm:$0xff]
        %v2322 = vld [vmem:[%s3 + $0xf0] sm:$0xff]
        %v2323 = vld [vmem:[%s3 + $0xf8] sm:$0xff]
        %v2324 = vld [vmem:[%s3 + $0x100] sm:$0xff]
        %v2325 = vld [vmem:[%s3 + $0x108] sm:$0xff]
        %v2326 = vld [vmem:[%s3 + $0x110] sm:$0xff]
        %v2327 = vld [vmem:[%s3 + $0x118] sm:$0xff]
        %v2328 = vld [vmem:[%s3 + $0x120] sm:$0xff]
        %v2329 = vld [vmem:[%s3 + $0x128] sm:$0xff]
        %v2330 = vld [vmem:[%s3 + $0x130] sm:$0xff]
        %v2331 = vld [vmem:[%s3 + $0x138] sm:$0xff]
        %v2332 = vld [vmem:[%s3 + $0x140] sm:$0xff]
        %v2333 = vld [vmem:[%s3 + $0x148] sm:$0xff]
        %v2334 = vld [vmem:[%s3 + $0x150] sm:$0xff]
        %v2335 = vld [vmem:[%s3 + $0x158] sm:$0xff]
        %v2336 = vld [vmem:[%s3 + $0x160] sm:$0xff]
        %v2337 = vld [vmem:[%s3 + $0x168] sm:$0xff]
        %v2338 = vld [vmem:[%s3 + $0x170] sm:$0xff]
        %v2339 = vld [vmem:[%s3 + $0x178] sm:$0xff]
        %v2340 = vld [vmem:[%s4] sm:$0x1]
        %v2342 = vlaneseq
        %v2343 = vshrl.u32 %v2342, 7
        %v2344 = vsub.s32 0, %v2343
        %v2345 = vrot.slane %v2340, %v2344
        %vm2371 = vcmask 1041409
        %v2372 = vsel %vm2371, %v2151, %v2130
        %vm2373 = vcmask 1042434
        %v2374 = vsel %vm2373, %v2172, %v2372
        %vm2375 = vcmask 1043459
        %v2376 = vsel %vm2375, %v2193, %v2374
        %vm2377 = vcmask 1044484
        %v2378 = vsel %vm2377, %v2214, %v2376
        %vm2379 = vcmask 1045509
        %v2380 = vsel %vm2379, %v2235, %v2378
        %vm2381 = vcmask 1046534
        %v2382 = vsel %vm2381, %v2256, %v2380
        %vm2383 = vcmask 1047559
        %v2384 = vsel %vm2383, %v2277, %v2382
        %v2385 = vsel %vm2371, %v2158, %v2137
        %v2386 = vsel %vm2373, %v2179, %v2385
        %v2387 = vsel %vm2375, %v2200, %v2386
        %v2388 = vsel %vm2377, %v2221, %v2387
        %v2389 = vsel %vm2379, %v2242, %v2388
        %v2390 = vsel %vm2381, %v2263, %v2389
        %v2391 = vsel %vm2383, %v2284, %v2390
        %v2392 = vsel %vm2371, %v2165, %v2144
        %v2393 = vsel %vm2373, %v2186, %v2392
        %v2394 = vsel %vm2375, %v2207, %v2393
        %v2395 = vsel %vm2377, %v2228, %v2394
        %v2396 = vsel %vm2379, %v2249, %v2395
        %v2397 = vsel %vm2381, %v2270, %v2396
        %v2398 = vsel %vm2383, %v2291, %v2397
        %2402 = vmatprep.subr.mxu0 0.0
        %2403 = vmatpush1.msra.mxu0 %v2292
        %2404 = vmatprep.subr.mxu0 0.0
        %2405 = vmatpush1.msra.mxu0 %v2293
        %2406 = vmatprep.subr.mxu0 0.0
        %2407 = vmatpush1.msra.mxu0 %v2294
        %2408 = vmatprep.subr.mxu0 0.0
        %2409 = vmatpush1.msra.mxu0 %v2295
        %2410 = vmatprep.subr.mxu0 0.0
        %2411 = vmatpush1.msra.mxu0 %v2296
        %2412 = vmatprep.subr.mxu0 0.0
        %2413 = vmatpush1.msra.mxu0 %v2297
        %2414 = vmatprep.subr.mxu0 0.0
        %2415 = vmatpush1.msra.mxu0 %v2298
        %2416 = vmatprep.subr.mxu0 0.0
        %2417 = vmatpush1.msra.mxu0 %v2299
        %2418 = vmatprep.subr.mxu0 0.0
        %2419 = vmatpush1.msra.mxu0 %v2300
        %2420 = vmatprep.subr.mxu0 0.0
        %2421 = vmatpush1.msra.mxu0 %v2301
        %2422 = vmatprep.subr.mxu0 0.0
        %2423 = vmatpush1.msra.mxu0 %v2302
        %2424 = vmatprep.subr.mxu0 0.0
        %2425 = vmatpush1.msra.mxu0 %v2303
        %2426 = vmatprep.subr.mxu0 0.0
        %2427 = vmatpush1.msra.mxu0 %v2304
        %2428 = vmatprep.subr.mxu0 0.0
        %2429 = vmatpush1.msra.mxu0 %v2305
        %2430 = vmatprep.subr.mxu0 0.0
        %2431 = vmatpush1.msra.mxu0 %v2306
        %2432 = vmatprep.subr.mxu0 0.0
        %2433 = vmatpush1.msra.mxu0 %v2307
        %2434 = vmatprep.subr.mxu0 0.0
        %2435 = vmatpush1.msra.mxu0 %v2308
        %2436 = vmatprep.subr.mxu0 0.0
        %2437 = vmatpush1.msra.mxu0 %v2309
        %2438 = vmatprep.subr.mxu0 0.0
        %2439 = vmatpush1.msra.mxu0 %v2310
        %2440 = vmatprep.subr.mxu0 0.0
        %2441 = vmatpush1.msra.mxu0 %v2311
        %2442 = vmatprep.subr.mxu0 0.0
        %2443 = vmatpush1.msra.mxu0 %v2312
        %2444 = vmatprep.subr.mxu0 0.0
        %2445 = vmatpush1.msra.mxu0 %v2313
        %2446 = vmatprep.subr.mxu0 0.0
        %2447 = vmatpush1.msra.mxu0 %v2314
        %2448 = vmatprep.subr.mxu0 0.0
        %2449 = vmatpush1.msra.mxu0 %v2315
        %2450 = vmatprep.subr.mxu0 0.0
        %2451 = vmatpush1.msra.mxu0 %v2316
        %2452 = vmatprep.subr.mxu0 0.0
        %2453 = vmatpush1.msra.mxu0 %v2317
        %2454 = vmatprep.subr.mxu0 0.0
        %2455 = vmatpush1.msra.mxu0 %v2318
        %2456 = vmatprep.subr.mxu0 0.0
        %2457 = vmatpush1.msra.mxu0 %v2319
        %2458 = vmatprep.subr.mxu0 0.0
        %2459 = vmatpush1.msra.mxu0 %v2320
        %2460 = vmatprep.subr.mxu0 0.0
        %2461 = vmatpush1.msra.mxu0 %v2321
        %2462 = vmatprep.subr.mxu0 0.0
        %2463 = vmatpush1.msra.mxu0 %v2322
        %2464 = vmatprep.subr.mxu0 0.0
        %2465 = vmatpush1.msra.mxu0 %v2323
        %2466 = vmatprep.mubr.f32.mxu0 %v2391
        %2467 = vmatmul.mubr.f32.gmra.mrb[0].mxu0 %v2384
        %v2468 = vpop.f32.mrb[0].mxu0
        %v2469 = vadd.f32 %v2345, %v2468
        %v2470 = vpop.f32.mrb[0].mxu0
        %2471 = vdwg.mxu0
        %2472 = vmatprep.subr.mxu0 0.0
        %2473 = vmatpush1.msra.mxu0 %v2324
        %2474 = vmatprep.subr.mxu0 0.0
        %2475 = vmatpush1.msra.mxu0 %v2325
        %2476 = vmatprep.subr.mxu0 0.0
        %2477 = vmatpush1.msra.mxu0 %v2326
        %2478 = vmatprep.subr.mxu0 0.0
        %2479 = vmatpush1.msra.mxu0 %v2327
        %2480 = vmatprep.subr.mxu0 0.0
        %2481 = vmatpush1.msra.mxu0 %v2328
        %2482 = vmatprep.subr.mxu0 0.0
        %2483 = vmatpush1.msra.mxu0 %v2329
        %2484 = vmatprep.subr.mxu0 0.0
        %2485 = vmatpush1.msra.mxu0 %v2330
        %2486 = vmatprep.subr.mxu0 0.0
        %2487 = vmatpush1.msra.mxu0 %v2331
        %2488 = vmatprep.subr.mxu0 0.0
        %2489 = vmatpush1.msra.mxu0 %v2332
        %2490 = vmatprep.subr.mxu0 0.0
        %2491 = vmatpush1.msra.mxu0 %v2333
        %2492 = vmatprep.subr.mxu0 0.0
        %2493 = vmatpush1.msra.mxu0 %v2334
        %2494 = vmatprep.subr.mxu0 0.0
        %2495 = vmatpush1.msra.mxu0 %v2335
        %2496 = vmatprep.subr.mxu0 0.0
        %2497 = vmatpush1.msra.mxu0 %v2336
        %2498 = vmatprep.subr.mxu0 0.0
        %2499 = vmatpush1.msra.mxu0 %v2337
        %2500 = vmatprep.subr.mxu0 0.0
        %2501 = vmatpush1.msra.mxu0 %v2338
        %2502 = vmatprep.subr.mxu0 0.0
        %2503 = vmatpush1.msra.mxu0 %v2339
        %2504 = vmatprep.subr.mxu0 0.0
        %2505 = vmatpush1.msra.mxu0 0.0
        %2506 = vmatprep.subr.mxu0 0.0
        %2507 = vmatpush1.msra.mxu0 0.0
        %2508 = vmatprep.subr.mxu0 0.0
        %2509 = vmatpush1.msra.mxu0 0.0
        %2510 = vmatprep.subr.mxu0 0.0
        %2511 = vmatpush1.msra.mxu0 0.0
        %2512 = vmatprep.subr.mxu0 0.0
        %2513 = vmatpush1.msra.mxu0 0.0
        %2514 = vmatprep.subr.mxu0 0.0
        %2515 = vmatpush1.msra.mxu0 0.0
        %2516 = vmatprep.subr.mxu0 0.0
        %2517 = vmatpush1.msra.mxu0 0.0
        %2518 = vmatprep.subr.mxu0 0.0
        %2519 = vmatpush1.msra.mxu0 0.0
        %2520 = vmatprep.subr.mxu0 0.0
        %2521 = vmatpush1.msra.mxu0 0.0
        %2522 = vmatprep.subr.mxu0 0.0
        %2523 = vmatpush1.msra.mxu0 0.0
        %2524 = vmatprep.subr.mxu0 0.0
        %2525 = vmatpush1.msra.mxu0 0.0
        %2526 = vmatprep.subr.mxu0 0.0
        %2527 = vmatpush1.msra.mxu0 0.0
        %2528 = vmatprep.subr.mxu0 0.0
        %2529 = vmatpush1.msra.mxu0 0.0
        %2530 = vmatprep.subr.mxu0 0.0
        %2531 = vmatpush1.msra.mxu0 0.0
        %2532 = vmatprep.subr.mxu0 0.0
        %2533 = vmatpush1.msra.mxu0 0.0
        %2534 = vmatprep.subr.mxu0 0.0
        %2535 = vmatpush1.msra.mxu0 0.0
        %2536 = vmatprep.mubr.f32.mxu0 0.0
        %2537 = vmatmul.mubr.f32.gmra.mrb[0].mxu0 %v2398
        %v2538 = vpop.f32.mrb[0].mxu0
        %v2539 = vadd.f32 %v2469, %v2538
        %v2540 = vpop.f32.mrb[0].mxu0
        %2541 = vdwg.mxu0
        %vm2542 = vcmask 15360
        %v2543 = vsel %vm2542, %v2539, -inf
        %2544 = vmax.xlane.f32.xlu0 %v2543
        %v2545 = vpop.xlane.xlu0 %2544
        %v2546 = vsub.f32 %v2539, %v2545
        %v2547 = vmul.f32 %v2546, 1.442695
        %v2548 = vpow.pop %v2547
        %v2549 = vsel %vm2542, %v2548, 0.0
        %2550 = vadd.xlane.f32.xlu0 %v2549
        %v2551 = vpop.xlane.xlu0 %2550
        %v2552 = vlog2.pop %v2551
        %v2553 = vmul.f32 %v2552, 0.6931472
        %v2554 = vsub.f32 %v2546, %v2553
        %2555 = vst.msk [vmem:[%s242] sm:$0xff] %vm2542, %v2554
        %p2556 = scmp.lt.s32.totalorder %s17, 1
        %s2557 = scalar_select %p2556, %s17, 1
        %s2558 = smul.addr %s2557, 8
        %s2559 = scalar_lea.vmem %s5, %s2558
        // Predicated region
        $region45: #{tpu_custom_call.1} parent=39 // pred_check
          %p2560 = pneg %p145
        $region46: #{tpu_custom_call.1} parent=39 // pred_check_branch
          %2562 = sbr.rel (%p2560) target = $region48
        $region47: #{tpu_custom_call.1} parent=39 // pred_region
          _
        $region48: #{tpu_custom_call.1} parent=39 // pred_fallthru
          _
      $region40: #{tpu_custom_call.1} parent=5 // pred_fallthru
        _
      %p2563 = scmp.le.s32.totalorder 2, %s12
      // Predicated region
      $region49: #{tpu_custom_call.1} parent=5 // pred_check
        %p2564 = pneg %p2563
      $region50: #{tpu_custom_call.1} parent=5 // pred_check_branch
        %2566 = sbr.rel (%p2564) target = $region52
      $region51: #{tpu_custom_call.1} parent=5 // pred_region
        %s2567 = ssub.s32 %s12, 2
        // Predicated region
        $region53: #{tpu_custom_call.1} parent=51 // pred_check
          %p2568 = pneg %p151
        $region54: #{tpu_custom_call.1} parent=51 // pred_check_branch
          %2570 = sbr.rel (%p2568) target = $region56
        $region55: #{tpu_custom_call.1} parent=51 // pred_region
          %p2571 = scmp.lt.s32.totalorder %s18, 1
          %s2572 = scalar_select %p2571, %s18, 1
          %s2573 = smul.addr %s2572, 8
          %s2574 = scalar_lea.vmem %s5, %s2573
        $region56: #{tpu_custom_call.1} parent=51 // pred_fallthru
          _
      $region52: #{tpu_custom_call.1} parent=5 // pred_fallthru
        _
    $region6: #{tpu_custom_call.1} parent=1 // loop_footer
      %s16 = sadd.s32 1, %s12
    $region7: #{tpu_custom_call.1} parent=1 // loop_footer_branch
      %11 = sbr.rel target = $region3
    $region8: #{tpu_custom_call.1} parent=1 // loop_exit
      _
    %2575 = vsyncpa [#allocation3], 1
    %s2576 = scalar_lea.sflag [#allocation3], 1
    %2577 = vsyncpa %s2576, 1

</llo_original>
